<compile_context>
chip_gen: v7x
topology: tpu7x:2x2x1
jax: 0.10.0
libtpu: 0.0.40
codegen_flags: <defaults>
</compile_context>

<pallas_src>
import itertools

import jax
import jax.numpy as jnp
from jax.experimental import pallas as pl
from jax.experimental.pallas import tpu as pltpu

INPUT_DIM = 42
LATENT_DIM = 256
X_PAD = 128  # 42-wide input/output padded to a lane-dense 128


def _round_up(n, m):
    return ((n + m - 1) // m) * m


# ---- packed-bias layout (static, lane-aligned slot offsets) -----------------
# Per linear layer: encoder (4), fused mu/logvar head (1), decoder (5).
_BIAS_USED = [512, 256, 128, 64,          # encoder
              2 * LATENT_DIM,             # fused mu/logvar head
              64, 128, 256, 512, X_PAD]   # decoder (last padded 42 -> 128)
_BIAS_SLOT = [_round_up(w, 128) for w in _BIAS_USED]
_BIAS_OFF = list(itertools.accumulate([0] + _BIAS_SLOT[:-1]))
BIAS_TOTAL = sum(_BIAS_SLOT)              # 2688 = 21 * 128


# ---- kernel -----------------------------------------------------------------
def vae_kernel(x_ref, eps_ref,
               we1, we2, we3, we4, wmulv,
               wd1, wd2, wd3, wd4, wd5,
               bias_ref,
               xrec_ref, mulv_ref):
    def bias(idx):
        off = _BIAS_OFF[idx]
        return bias_ref[:, off:off + _BIAS_USED[idx]]

    def linear(h_bf16, w_ref, bidx):
        # bf16 x bf16 on the MXU, f32 accumulation; bias add in f32.
        return jnp.dot(h_bf16, w_ref[...],
                       preferred_element_type=jnp.float32) + bias(bidx)

    def relu_bf16(h_f32):
        # ReLU in f32, then carry the activation in bf16 (next dot is bf16).
        return jnp.maximum(h_f32, 0.0).astype(jnp.bfloat16)

    # ---- Encoder: 42(pad 128) -> 512 -> 256 -> 128 -> 64, ReLU each ----
    h = x_ref[...]                               # bf16 (TILE_B, 128)
    h = relu_bf16(linear(h, we1, 0))
    h = relu_bf16(linear(h, we2, 1))
    h = relu_bf16(linear(h, we3, 2))
    h = relu_bf16(linear(h, we4, 3))

    # ---- fused mu / logvar head: 64 -> 512 (mu | logvar), kept f32 ----
    mulv = linear(h, wmulv, 4)                   # f32 (TILE_B, 512)
    mu = mulv[:, :LATENT_DIM]
    logvar = mulv[:, LATENT_DIM:]

    # ---- Reparameterize (f32 elementwise, EUP exp) ----
    std = jnp.exp(0.5 * logvar)
    z = mu + eps_ref[...].astype(jnp.float32) * std

    # ---- Decoder: 256 -> 64 -> 128 -> 256 -> 512 -> 42(pad 128) ----
    d = relu_bf16(linear(z.astype(jnp.bfloat16), wd1, 5))
    d = relu_bf16(linear(d, wd2, 6))
    d = relu_bf16(linear(d, wd3, 7))
    d = relu_bf16(linear(d, wd4, 8))
    xrec = linear(d, wd5, 9)                     # final layer: no activation

    xrec_ref[...] = xrec
    mulv_ref[...] = mulv                         # one lane-dense 512-wide store


# ---- parameter init (PyTorch nn.Linear default) + packing -------------------
def _torch_linear_init(key, in_dim, out_dim):
    kw, kb = jax.random.split(key)
    bound = 1.0 / jnp.sqrt(jnp.float32(in_dim))
    w = jax.random.uniform(kw, (in_dim, out_dim), jnp.float32, -bound, bound)
    b = jax.random.uniform(kb, (out_dim,), jnp.float32, -bound, bound)
    return w, b


def init_vae_params(key):
    enc_dims = [(INPUT_DIM, 512), (512, 256), (256, 128), (128, 64)]
    head_dims = [(64, LATENT_DIM), (64, LATENT_DIM)]              # mu, logvar
    dec_dims = [(LATENT_DIM, 64), (64, 128), (128, 256), (256, 512),
                (512, INPUT_DIM)]
    all_dims = enc_dims + head_dims + dec_dims
    keys = jax.random.split(key, len(all_dims))
    raw = [_torch_linear_init(k, di, do) for k, (di, do) in zip(keys, all_dims)]

    (we1, be1), (we2, be2), (we3, be3), (we4, be4) = raw[0:4]
    (wmu, bmu), (wlv, blv) = raw[4:6]
    (wd1, bd1), (wd2, bd2), (wd3, bd3), (wd4, bd4), (wd5, bd5) = raw[6:11]

    # Zero-pad the 42-wide dims to 128 lanes (results unchanged: padded input
    # lanes are zero, padded weight rows/cols are zero).
    we1p = jnp.zeros((X_PAD, 512), jnp.float32).at[:INPUT_DIM].set(we1)
    wd5p = jnp.zeros((512, X_PAD), jnp.float32).at[:, :INPUT_DIM].set(wd5)
    bd5p = jnp.zeros((X_PAD,), jnp.float32).at[:INPUT_DIM].set(bd5)

    # Fuse mu / logvar heads into a single (64, 512) matmul.
    wmulv = jnp.concatenate([wmu, wlv], axis=1)
    bmulv = jnp.concatenate([bmu, blv], axis=0)

    weights = [we1p, we2, we3, we4, wmulv, wd1, wd2, wd3, wd4, wd5p]
    weights = [w.astype(jnp.bfloat16) for w in weights]

    biases = [be1, be2, be3, be4, bmulv, bd1, bd2, bd3, bd4, bd5p]
    packed = jnp.zeros((1, BIAS_TOTAL), jnp.float32)
    for b, off in zip(biases, _BIAS_OFF):
        packed = packed.at[0, off:off + b.shape[0]].set(b)
    return weights, packed


# ---- tiling policy -----------------------------------------------------------
def _choose_tiling(B):
    """Return (padded_batch, tile) with tile a multiple of 256 (>=2 tiles when
    the batch allows it, so v7x's two TensorCores both get work)."""
    Bp = _round_up(max(B, 8), 8)
    if Bp <= 256:
        return Bp, Bp                      # single small tile
    tile = min(512, _round_up(-(-Bp // 2), 256))
    Bp = _round_up(Bp, tile)
    return Bp, tile


# ---- wrapper -----------------------------------------------------------------
@jax.jit
def vae_forward(x, eps, weights, bias_packed):
    B = x.shape[0]
    Bp, TILE_B = _choose_tiling(B)
    n_tiles = Bp // TILE_B

    # Pad batch to a tile multiple; pad input features 42 -> 128 with zeros;
    # stream x and eps as bf16 (x is consumed by a bf16 MXU dot anyway).
    xp = jnp.zeros((Bp, X_PAD), jnp.bfloat16).at[:B, :INPUT_DIM].set(
        x.astype(jnp.bfloat16))
    epsp = jnp.zeros((Bp, LATENT_DIM), jnp.bfloat16).at[:B].set(
        eps.astype(jnp.bfloat16))

    def batch_spec(feat):
        return pl.BlockSpec((TILE_B, feat), lambda i: (i, 0))

    def const_spec(shape):
        return pl.BlockSpec(shape, lambda i: (0, 0))   # resident across tiles

    in_specs = ([batch_spec(X_PAD), batch_spec(LATENT_DIM)]
                + [const_spec(w.shape) for w in weights]
                + [const_spec(bias_packed.shape)])
    out_specs = (batch_spec(X_PAD), batch_spec(2 * LATENT_DIM))
    out_shape = (
        jax.ShapeDtypeStruct((Bp, X_PAD), jnp.float32),            # xrec (pad)
        jax.ShapeDtypeStruct((Bp, 2 * LATENT_DIM), jnp.float32),   # mu|logvar
    )

    fn = pl.pallas_call(
        vae_kernel,
        out_shape=out_shape,
        grid=(n_tiles,),
        in_specs=in_specs,
        out_specs=out_specs,
        compiler_params=pltpu.CompilerParams(
            dimension_semantics=("parallel",),   # v7x: batch tiles on 2 TCs
            vmem_limit_bytes=32 << 20,
        ),
    )
    xrec_p, mulv_p = fn(xp, epsp, *weights, bias_packed)
    return (xrec_p[:B, :INPUT_DIM],
            mulv_p[:B, :LATENT_DIM],
            mulv_p[:B, LATENT_DIM:])


# ---- plain-JAX reference (same bf16-activation math) for a sanity check ------
def ref_forward(x, eps, weights, bias_packed):
    bs = [bias_packed[0, off:off + w] for off, w in zip(_BIAS_OFF, _BIAS_USED)]
    wf = [w.astype(jnp.float32) for w in weights]

    def lin(h_bf, w, b):
        return jnp.dot(h_bf.astype(jnp.float32), w) + b

    h = jnp.pad(x, ((0, 0), (0, X_PAD - INPUT_DIM))).astype(jnp.bfloat16)
    for i in range(4):
        h = jnp.maximum(lin(h, wf[i], bs[i]), 0.0).astype(jnp.bfloat16)
    mulv = lin(h, wf[4], bs[4])
    mu, logvar = mulv[:, :LATENT_DIM], mulv[:, LATENT_DIM:]
    z = mu + eps.astype(jnp.bfloat16).astype(jnp.float32) * jnp.exp(0.5 * logvar)
    d = z.astype(jnp.bfloat16)
    for i in range(5, 9):
        d = jnp.maximum(lin(d, wf[i], bs[i]), 0.0).astype(jnp.bfloat16)
    xrec = lin(d, wf[9], bs[9])[:, :INPUT_DIM]
    return xrec, mu, logvar


if __name__ == "__main__":
    key = jax.random.PRNGKey(0)
    k_params = jax.random.fold_in(key, 0)
    weights, bias_packed = init_vae_params(k_params)

    # B=8: single-tile path.  B=272: padded multi-tile (2 x 256) path that also
    # exercises the parallel grid axis.
    for B in (8, 272):
        kx, ke = jax.random.split(jax.random.fold_in(key, B))
        x = jax.random.normal(kx, (B, INPUT_DIM), dtype=jnp.float32)
        # eps ~ N(0,1): same role as torch.randn_like(std) in reparameterize().
        eps = jax.random.normal(ke, (B, LATENT_DIM), dtype=jnp.float32)

        x_rec, mu, logvar = vae_forward(x, eps, weights, bias_packed)
        jax.block_until_ready((x_rec, mu, logvar))

        assert x_rec.shape == (B, INPUT_DIM)
        assert mu.shape == (B, LATENT_DIM)
        assert logvar.shape == (B, LATENT_DIM)

        xr_ref, mu_ref, lv_ref = ref_forward(x, eps, weights, bias_packed)
        assert bool(jnp.allclose(mu, mu_ref, atol=2e-2, rtol=2e-2))
        assert bool(jnp.allclose(logvar, lv_ref, atol=2e-2, rtol=2e-2))
        assert bool(jnp.allclose(x_rec, xr_ref, atol=2e-2, rtol=2e-2))

    print("KERNEL_OK")
</pallas_src>

<mosaic_0001>
module attributes {stable_mosaic.version = 11 : i64} {
  func.func @vae_kernel(%arg0: i32, %arg1: memref<8x128xbf16, #tpu.memory_space<vmem>>, %arg2: memref<8x256xbf16, #tpu.memory_space<vmem>>, %arg3: memref<128x512xbf16, #tpu.memory_space<vmem>>, %arg4: memref<512x256xbf16, #tpu.memory_space<vmem>>, %arg5: memref<256x128xbf16, #tpu.memory_space<vmem>>, %arg6: memref<128x64xbf16, #tpu.memory_space<vmem>>, %arg7: memref<64x512xbf16, #tpu.memory_space<vmem>>, %arg8: memref<256x64xbf16, #tpu.memory_space<vmem>>, %arg9: memref<64x128xbf16, #tpu.memory_space<vmem>>, %arg10: memref<128x256xbf16, #tpu.memory_space<vmem>>, %arg11: memref<256x512xbf16, #tpu.memory_space<vmem>>, %arg12: memref<512x128xbf16, #tpu.memory_space<vmem>>, %arg13: memref<1x2688xf32, #tpu.memory_space<vmem>>, %arg14: memref<8x128xf32, #tpu.memory_space<vmem>>, %arg15: memref<8x512xf32, #tpu.memory_space<vmem>>) attributes {dimension_semantics = [#tpu.dimension_semantics<parallel>], iteration_bounds = array<i64: 1>, scalar_prefetch = 0 : i64, scratch_operands = 0 : i64, tpu.core_type = #tpu.core_type<tc>, window_params = [{transform_indices = @transform_0, window_bounds = array<i64: 8, 128>}, {transform_indices = @transform_1, window_bounds = array<i64: 8, 256>}, {pipeline_mode = #tpu.pipeline_mode<synchronous>, transform_indices = @transform_2, window_bounds = array<i64: 128, 512>}, {pipeline_mode = #tpu.pipeline_mode<synchronous>, transform_indices = @transform_3, window_bounds = array<i64: 512, 256>}, {pipeline_mode = #tpu.pipeline_mode<synchronous>, transform_indices = @transform_4, window_bounds = array<i64: 256, 128>}, {pipeline_mode = #tpu.pipeline_mode<synchronous>, transform_indices = @transform_5, window_bounds = array<i64: 128, 64>}, {pipeline_mode = #tpu.pipeline_mode<synchronous>, transform_indices = @transform_6, window_bounds = array<i64: 64, 512>}, {pipeline_mode = #tpu.pipeline_mode<synchronous>, transform_indices = @transform_7, window_bounds = array<i64: 256, 64>}, {pipeline_mode = #tpu.pipeline_mode<synchronous>, transform_indices = @transform_8, window_bounds = array<i64: 64, 128>}, {pipeline_mode = #tpu.pipeline_mode<synchronous>, transform_indices = @transform_9, window_bounds = array<i64: 128, 256>}, {pipeline_mode = #tpu.pipeline_mode<synchronous>, transform_indices = @transform_10, window_bounds = array<i64: 256, 512>}, {pipeline_mode = #tpu.pipeline_mode<synchronous>, transform_indices = @transform_11, window_bounds = array<i64: 512, 128>}, {pipeline_mode = #tpu.pipeline_mode<synchronous>, transform_indices = @transform_12, window_bounds = array<i64: 1, 2688>}, {transform_indices = @transform_13, window_bounds = array<i64: 8, 128>}, {transform_indices = @transform_14, window_bounds = array<i64: 8, 512>}]} {
    %c0 = arith.constant 0 : index
    %c0_0 = arith.constant 0 : index
    %0 = vector.load %arg1[%c0, %c0_0] : memref<8x128xbf16, #tpu.memory_space<vmem>>, vector<8x128xbf16>
    %c0_1 = arith.constant 0 : index
    %c0_2 = arith.constant 0 : index
    %1 = vector.load %arg3[%c0_1, %c0_2] : memref<128x512xbf16, #tpu.memory_space<vmem>>, vector<128x512xbf16>
    %cst = arith.constant dense<0.000000e+00> : vector<8x512xf32>
    %2 = tpu.matmul %0, %1, %cst {dimension_numbers = #tpu.dot_dimension_numbers<[1], [0], [0], [1], [0, 0, 1, 1], [], []>} : vector<8x128xbf16>, vector<128x512xbf16>, vector<8x512xf32> -> vector<8x512xf32>
    %c0_3 = arith.constant 0 : index
    %c0_4 = arith.constant 0 : index
    %3 = vector.load %arg13[%c0_3, %c0_4] : memref<1x2688xf32, #tpu.memory_space<vmem>>, vector<1x512xf32>
    %4 = vector.broadcast %3 : vector<1x512xf32> to vector<8x512xf32>
    %5 = arith.addf %2, %4 : vector<8x512xf32>
    %cst_5 = arith.constant 0.000000e+00 : f32
    %6 = vector.broadcast %cst_5 : f32 to vector<8x512xf32>
    %7 = arith.maximumf %5, %6 : vector<8x512xf32>
    %8 = arith.truncf %7 : vector<8x512xf32> to vector<8x512xbf16>
    %c0_6 = arith.constant 0 : index
    %c0_7 = arith.constant 0 : index
    %9 = vector.load %arg4[%c0_6, %c0_7] : memref<512x256xbf16, #tpu.memory_space<vmem>>, vector<512x256xbf16>
    %cst_8 = arith.constant dense<0.000000e+00> : vector<8x256xf32>
    %10 = tpu.matmul %8, %9, %cst_8 {dimension_numbers = #tpu.dot_dimension_numbers<[1], [0], [0], [1], [0, 0, 1, 1], [], []>} : vector<8x512xbf16>, vector<512x256xbf16>, vector<8x256xf32> -> vector<8x256xf32>
    %c0_9 = arith.constant 0 : index
    %c512 = arith.constant 512 : index
    %11 = vector.load %arg13[%c0_9, %c512] : memref<1x2688xf32, #tpu.memory_space<vmem>>, vector<1x256xf32>
    %12 = vector.broadcast %11 : vector<1x256xf32> to vector<8x256xf32>
    %13 = arith.addf %10, %12 : vector<8x256xf32>
    %cst_10 = arith.constant 0.000000e+00 : f32
    %14 = vector.broadcast %cst_10 : f32 to vector<8x256xf32>
    %15 = arith.maximumf %13, %14 : vector<8x256xf32>
    %16 = arith.truncf %15 : vector<8x256xf32> to vector<8x256xbf16>
    %c0_11 = arith.constant 0 : index
    %c0_12 = arith.constant 0 : index
    %17 = vector.load %arg5[%c0_11, %c0_12] : memref<256x128xbf16, #tpu.memory_space<vmem>>, vector<256x128xbf16>
    %cst_13 = arith.constant dense<0.000000e+00> : vector<8x128xf32>
    %18 = tpu.matmul %16, %17, %cst_13 {dimension_numbers = #tpu.dot_dimension_numbers<[1], [0], [0], [1], [0, 0, 1, 1], [], []>} : vector<8x256xbf16>, vector<256x128xbf16>, vector<8x128xf32> -> vector<8x128xf32>
    %c0_14 = arith.constant 0 : index
    %c768 = arith.constant 768 : index
    %19 = vector.load %arg13[%c0_14, %c768] : memref<1x2688xf32, #tpu.memory_space<vmem>>, vector<1x128xf32>
    %20 = vector.broadcast %19 : vector<1x128xf32> to vector<8x128xf32>
    %21 = arith.addf %18, %20 : vector<8x128xf32>
    %cst_15 = arith.constant 0.000000e+00 : f32
    %22 = vector.broadcast %cst_15 : f32 to vector<8x128xf32>
    %23 = arith.maximumf %21, %22 : vector<8x128xf32>
    %24 = arith.truncf %23 : vector<8x128xf32> to vector<8x128xbf16>
    %c0_16 = arith.constant 0 : index
    %c0_17 = arith.constant 0 : index
    %25 = vector.load %arg6[%c0_16, %c0_17] : memref<128x64xbf16, #tpu.memory_space<vmem>>, vector<128x64xbf16>
    %cst_18 = arith.constant dense<0.000000e+00> : vector<8x64xf32>
    %26 = tpu.matmul %24, %25, %cst_18 {dimension_numbers = #tpu.dot_dimension_numbers<[1], [0], [0], [1], [0, 0, 1, 1], [], []>} : vector<8x128xbf16>, vector<128x64xbf16>, vector<8x64xf32> -> vector<8x64xf32>
    %c0_19 = arith.constant 0 : index
    %c896 = arith.constant 896 : index
    %27 = vector.load %arg13[%c0_19, %c896] : memref<1x2688xf32, #tpu.memory_space<vmem>>, vector<1x64xf32>
    %28 = vector.broadcast %27 : vector<1x64xf32> to vector<8x64xf32>
    %29 = arith.addf %26, %28 : vector<8x64xf32>
    %cst_20 = arith.constant 0.000000e+00 : f32
    %30 = vector.broadcast %cst_20 : f32 to vector<8x64xf32>
    %31 = arith.maximumf %29, %30 : vector<8x64xf32>
    %32 = arith.truncf %31 : vector<8x64xf32> to vector<8x64xbf16>
    %c0_21 = arith.constant 0 : index
    %c0_22 = arith.constant 0 : index
    %33 = vector.load %arg7[%c0_21, %c0_22] : memref<64x512xbf16, #tpu.memory_space<vmem>>, vector<64x512xbf16>
    %cst_23 = arith.constant dense<0.000000e+00> : vector<8x512xf32>
    %34 = tpu.matmul %32, %33, %cst_23 {dimension_numbers = #tpu.dot_dimension_numbers<[1], [0], [0], [1], [0, 0, 1, 1], [], []>} : vector<8x64xbf16>, vector<64x512xbf16>, vector<8x512xf32> -> vector<8x512xf32>
    %c0_24 = arith.constant 0 : index
    %c1024 = arith.constant 1024 : index
    %35 = vector.load %arg13[%c0_24, %c1024] : memref<1x2688xf32, #tpu.memory_space<vmem>>, vector<1x512xf32>
    %36 = vector.broadcast %35 : vector<1x512xf32> to vector<8x512xf32>
    %37 = arith.addf %34, %36 : vector<8x512xf32>
    %38 = vector.extract_strided_slice %37 {offsets = [0, 0], sizes = [8, 256], strides = [1, 1]} : vector<8x512xf32> to vector<8x256xf32>
    %39 = vector.extract_strided_slice %37 {offsets = [0, 256], sizes = [8, 256], strides = [1, 1]} : vector<8x512xf32> to vector<8x256xf32>
    %cst_25 = arith.constant 5.000000e-01 : f32
    %40 = vector.broadcast %cst_25 : f32 to vector<8x256xf32>
    %41 = arith.mulf %40, %39 : vector<8x256xf32>
    %42 = math.exp %41 : vector<8x256xf32>
    %c0_26 = arith.constant 0 : index
    %c0_27 = arith.constant 0 : index
    %43 = vector.load %arg2[%c0_26, %c0_27] : memref<8x256xbf16, #tpu.memory_space<vmem>>, vector<8x256xbf16>
    %44 = arith.extf %43 : vector<8x256xbf16> to vector<8x256xf32>
    %45 = arith.mulf %44, %42 : vector<8x256xf32>
    %46 = arith.addf %38, %45 : vector<8x256xf32>
    %47 = arith.truncf %46 : vector<8x256xf32> to vector<8x256xbf16>
    %c0_28 = arith.constant 0 : index
    %c0_29 = arith.constant 0 : index
    %48 = vector.load %arg8[%c0_28, %c0_29] : memref<256x64xbf16, #tpu.memory_space<vmem>>, vector<256x64xbf16>
    %cst_30 = arith.constant dense<0.000000e+00> : vector<8x64xf32>
    %49 = tpu.matmul %47, %48, %cst_30 {dimension_numbers = #tpu.dot_dimension_numbers<[1], [0], [0], [1], [0, 0, 1, 1], [], []>} : vector<8x256xbf16>, vector<256x64xbf16>, vector<8x64xf32> -> vector<8x64xf32>
    %c0_31 = arith.constant 0 : index
    %c1536 = arith.constant 1536 : index
    %50 = vector.load %arg13[%c0_31, %c1536] : memref<1x2688xf32, #tpu.memory_space<vmem>>, vector<1x64xf32>
    %51 = vector.broadcast %50 : vector<1x64xf32> to vector<8x64xf32>
    %52 = arith.addf %49, %51 : vector<8x64xf32>
    %cst_32 = arith.constant 0.000000e+00 : f32
    %53 = vector.broadcast %cst_32 : f32 to vector<8x64xf32>
    %54 = arith.maximumf %52, %53 : vector<8x64xf32>
    %55 = arith.truncf %54 : vector<8x64xf32> to vector<8x64xbf16>
    %c0_33 = arith.constant 0 : index
    %c0_34 = arith.constant 0 : index
    %56 = vector.load %arg9[%c0_33, %c0_34] : memref<64x128xbf16, #tpu.memory_space<vmem>>, vector<64x128xbf16>
    %cst_35 = arith.constant dense<0.000000e+00> : vector<8x128xf32>
    %57 = tpu.matmul %55, %56, %cst_35 {dimension_numbers = #tpu.dot_dimension_numbers<[1], [0], [0], [1], [0, 0, 1, 1], [], []>} : vector<8x64xbf16>, vector<64x128xbf16>, vector<8x128xf32> -> vector<8x128xf32>
    %c0_36 = arith.constant 0 : index
    %c1664 = arith.constant 1664 : index
    %58 = vector.load %arg13[%c0_36, %c1664] : memref<1x2688xf32, #tpu.memory_space<vmem>>, vector<1x128xf32>
    %59 = vector.broadcast %58 : vector<1x128xf32> to vector<8x128xf32>
    %60 = arith.addf %57, %59 : vector<8x128xf32>
    %cst_37 = arith.constant 0.000000e+00 : f32
    %61 = vector.broadcast %cst_37 : f32 to vector<8x128xf32>
    %62 = arith.maximumf %60, %61 : vector<8x128xf32>
    %63 = arith.truncf %62 : vector<8x128xf32> to vector<8x128xbf16>
    %c0_38 = arith.constant 0 : index
    %c0_39 = arith.constant 0 : index
    %64 = vector.load %arg10[%c0_38, %c0_39] : memref<128x256xbf16, #tpu.memory_space<vmem>>, vector<128x256xbf16>
    %cst_40 = arith.constant dense<0.000000e+00> : vector<8x256xf32>
    %65 = tpu.matmul %63, %64, %cst_40 {dimension_numbers = #tpu.dot_dimension_numbers<[1], [0], [0], [1], [0, 0, 1, 1], [], []>} : vector<8x128xbf16>, vector<128x256xbf16>, vector<8x256xf32> -> vector<8x256xf32>
    %c0_41 = arith.constant 0 : index
    %c1792 = arith.constant 1792 : index
    %66 = vector.load %arg13[%c0_41, %c1792] : memref<1x2688xf32, #tpu.memory_space<vmem>>, vector<1x256xf32>
    %67 = vector.broadcast %66 : vector<1x256xf32> to vector<8x256xf32>
    %68 = arith.addf %65, %67 : vector<8x256xf32>
    %cst_42 = arith.constant 0.000000e+00 : f32
    %69 = vector.broadcast %cst_42 : f32 to vector<8x256xf32>
    %70 = arith.maximumf %68, %69 : vector<8x256xf32>
    %71 = arith.truncf %70 : vector<8x256xf32> to vector<8x256xbf16>
    %c0_43 = arith.constant 0 : index
    %c0_44 = arith.constant 0 : index
    %72 = vector.load %arg11[%c0_43, %c0_44] : memref<256x512xbf16, #tpu.memory_space<vmem>>, vector<256x512xbf16>
    %cst_45 = arith.constant dense<0.000000e+00> : vector<8x512xf32>
    %73 = tpu.matmul %71, %72, %cst_45 {dimension_numbers = #tpu.dot_dimension_numbers<[1], [0], [0], [1], [0, 0, 1, 1], [], []>} : vector<8x256xbf16>, vector<256x512xbf16>, vector<8x512xf32> -> vector<8x512xf32>
    %c0_46 = arith.constant 0 : index
    %c2048 = arith.constant 2048 : index
    %74 = vector.load %arg13[%c0_46, %c2048] : memref<1x2688xf32, #tpu.memory_space<vmem>>, vector<1x512xf32>
    %75 = vector.broadcast %74 : vector<1x512xf32> to vector<8x512xf32>
    %76 = arith.addf %73, %75 : vector<8x512xf32>
    %cst_47 = arith.constant 0.000000e+00 : f32
    %77 = vector.broadcast %cst_47 : f32 to vector<8x512xf32>
    %78 = arith.maximumf %76, %77 : vector<8x512xf32>
    %79 = arith.truncf %78 : vector<8x512xf32> to vector<8x512xbf16>
    %c0_48 = arith.constant 0 : index
    %c0_49 = arith.constant 0 : index
    %80 = vector.load %arg12[%c0_48, %c0_49] : memref<512x128xbf16, #tpu.memory_space<vmem>>, vector<512x128xbf16>
    %cst_50 = arith.constant dense<0.000000e+00> : vector<8x128xf32>
    %81 = tpu.matmul %79, %80, %cst_50 {dimension_numbers = #tpu.dot_dimension_numbers<[1], [0], [0], [1], [0, 0, 1, 1], [], []>} : vector<8x512xbf16>, vector<512x128xbf16>, vector<8x128xf32> -> vector<8x128xf32>
    %c0_51 = arith.constant 0 : index
    %c2560 = arith.constant 2560 : index
    %82 = vector.load %arg13[%c0_51, %c2560] : memref<1x2688xf32, #tpu.memory_space<vmem>>, vector<1x128xf32>
    %83 = vector.broadcast %82 : vector<1x128xf32> to vector<8x128xf32>
    %84 = arith.addf %81, %83 : vector<8x128xf32>
    %c0_52 = arith.constant 0 : index
    %c0_53 = arith.constant 0 : index
    %85 = vector.load %arg14[%c0_52, %c0_53] : memref<8x128xf32, #tpu.memory_space<vmem>>, vector<8x128xf32>
    tpu.vector_store %arg14[%c0_52, %c0_53], %84 {strides = array<i32>} : memref<8x128xf32, #tpu.memory_space<vmem>>, vector<8x128xf32>,
    %c0_54 = arith.constant 0 : index
    %c0_55 = arith.constant 0 : index
    %86 = vector.load %arg15[%c0_54, %c0_55] : memref<8x512xf32, #tpu.memory_space<vmem>>, vector<8x512xf32>
    tpu.vector_store %arg15[%c0_54, %c0_55], %37 {strides = array<i32>} : memref<8x512xf32, #tpu.memory_space<vmem>>, vector<8x512xf32>,
    return
  }
  func.func @transform_0(%arg0: i32) -> (i32, i32) {
    %c0_i32 = arith.constant 0 : i32
    %c0_i32_0 = arith.constant 0 : i32
    return %arg0, %c0_i32 : i32, i32
  }
  func.func @transform_1(%arg0: i32) -> (i32, i32) {
    %c0_i32 = arith.constant 0 : i32
    %c0_i32_0 = arith.constant 0 : i32
    return %arg0, %c0_i32 : i32, i32
  }
  func.func @transform_2(%arg0: i32) -> (i32, i32) {
    %c0_i32 = arith.constant 0 : i32
    %c0_i32_0 = arith.constant 0 : i32
    %c0_i32_1 = arith.constant 0 : i32
    return %c0_i32, %c0_i32_0 : i32, i32
  }
  func.func @transform_3(%arg0: i32) -> (i32, i32) {
    %c0_i32 = arith.constant 0 : i32
    %c0_i32_0 = arith.constant 0 : i32
    %c0_i32_1 = arith.constant 0 : i32
    return %c0_i32, %c0_i32_0 : i32, i32
  }
  func.func @transform_4(%arg0: i32) -> (i32, i32) {
    %c0_i32 = arith.constant 0 : i32
    %c0_i32_0 = arith.constant 0 : i32
    %c0_i32_1 = arith.constant 0 : i32
    return %c0_i32, %c0_i32_0 : i32, i32
  }
  func.func @transform_5(%arg0: i32) -> (i32, i32) {
    %c0_i32 = arith.constant 0 : i32
    %c0_i32_0 = arith.constant 0 : i32
    %c0_i32_1 = arith.constant 0 : i32
    return %c0_i32, %c0_i32_0 : i32, i32
  }
  func.func @transform_6(%arg0: i32) -> (i32, i32) {
    %c0_i32 = arith.constant 0 : i32
    %c0_i32_0 = arith.constant 0 : i32
    %c0_i32_1 = arith.constant 0 : i32
    return %c0_i32, %c0_i32_0 : i32, i32
  }
  func.func @transform_7(%arg0: i32) -> (i32, i32) {
    %c0_i32 = arith.constant 0 : i32
    %c0_i32_0 = arith.constant 0 : i32
    %c0_i32_1 = arith.constant 0 : i32
    return %c0_i32, %c0_i32_0 : i32, i32
  }
  func.func @transform_8(%arg0: i32) -> (i32, i32) {
    %c0_i32 = arith.constant 0 : i32
    %c0_i32_0 = arith.constant 0 : i32
    %c0_i32_1 = arith.constant 0 : i32
    return %c0_i32, %c0_i32_0 : i32, i32
  }
  func.func @transform_9(%arg0: i32) -> (i32, i32) {
    %c0_i32 = arith.constant 0 : i32
    %c0_i32_0 = arith.constant 0 : i32
    %c0_i32_1 = arith.constant 0 : i32
    return %c0_i32, %c0_i32_0 : i32, i32
  }
  func.func @transform_10(%arg0: i32) -> (i32, i32) {
    %c0_i32 = arith.constant 0 : i32
    %c0_i32_0 = arith.constant 0 : i32
    %c0_i32_1 = arith.constant 0 : i32
    return %c0_i32, %c0_i32_0 : i32, i32
  }
  func.func @transform_11(%arg0: i32) -> (i32, i32) {
    %c0_i32 = arith.constant 0 : i32
    %c0_i32_0 = arith.constant 0 : i32
    %c0_i32_1 = arith.constant 0 : i32
    return %c0_i32, %c0_i32_0 : i32, i32
  }
  func.func @transform_12(%arg0: i32) -> (i32, i32) {
    %c0_i32 = arith.constant 0 : i32
    %c0_i32_0 = arith.constant 0 : i32
    %c0_i32_1 = arith.constant 0 : i32
    return %c0_i32, %c0_i32_0 : i32, i32
  }
  func.func @transform_13(%arg0: i32) -> (i32, i32) {
    %c0_i32 = arith.constant 0 : i32
    %c0_i32_0 = arith.constant 0 : i32
    return %arg0, %c0_i32 : i32, i32
  }
  func.func @transform_14(%arg0: i32) -> (i32, i32) {
    %c0_i32 = arith.constant 0 : i32
    %c0_i32_0 = arith.constant 0 : i32
    return %arg0, %c0_i32 : i32, i32
  }
}

</mosaic_0001>

<llo_original>
// kernel: vae_forward.1
$region0: #{vae_forward.1}
  #allocation0 [shape = 'u32[]', space=smem, size = 0x4, offset = 0x4, fixed_abs, tag = 'smem constant byte address 0x4 - core index']
  #allocation1 [shape = 'u32[144,128]{1,0:T(1,128)}', space=vmem, size = 0x12000, scoped, tag = 'internal scratch']
  %s0 = inlined_call_operand.vmem [shape: bf16[8,128], index: 0, kind: input, shape index: {}]
  %s1 = inlined_call_operand.vmem [shape: bf16[8,256], index: 1, kind: input, shape index: {}]
  %s2 = inlined_call_operand.vmem [shape: bf16[128,512], index: 2, kind: input, shape index: {}]
  %s3 = inlined_call_operand.hbm [shape: bf16[512,256], index: 3, kind: input, shape index: {}]
  %s4 = inlined_call_operand.hbm [shape: bf16[256,128], index: 4, kind: input, shape index: {}]
  %s5 = inlined_call_operand.vmem [shape: bf16[128,64], index: 5, kind: input, shape index: {}]
  %s6 = inlined_call_operand.hbm [shape: bf16[64,512], index: 6, kind: input, shape index: {}]
  %s7 = inlined_call_operand.vmem [shape: bf16[256,64], index: 7, kind: input, shape index: {}]
  %s8 = inlined_call_operand.vmem [shape: bf16[64,128], index: 8, kind: input, shape index: {}]
  %s9 = inlined_call_operand.hbm [shape: bf16[128,256], index: 9, kind: input, shape index: {}]
  %s10 = inlined_call_operand.hbm [shape: bf16[256,512], index: 10, kind: input, shape index: {}]
  %s11 = inlined_call_operand.hbm [shape: bf16[512,128], index: 11, kind: input, shape index: {}]
  %s12 = inlined_call_operand.vmem [shape: f32[1,2688], index: 12, kind: input, shape index: {}]
  %s13 = inlined_call_operand.hbm [shape: f32[8,128], index: 13, kind: output, shape index: {0}]
  %s14 = inlined_call_operand.vmem [shape: f32[8,512], index: 14, kind: output, shape index: {1}]
  %15 = xla_tuple %s13, %s14
  %s16 = sld [smem:[#allocation0]]
  $region94: #{vae_forward.1} parent=0
    _
  %s18 = ssub.s32 1, %s16
  %s19 = scalar_select 0, %s18, %s16
  $region1: #{vae_forward.1} parent=0
    #allocation2 [shape = 'u8[262144]{0}', space=vmem, size = 0x40000, scoped, tag = 'input window, operand 3, single buffered']
    #allocation3 [shape = 's32[1]{0}', space=sflag, size = 0x4, scoped, tag = 'scoped memory for vae_forward.1']
    #allocation4 [shape = 's32[1]{0}', space=sflag, size = 0x4, scoped, tag = 'scoped memory for vae_forward.1']
    #allocation5 [shape = 'u8[65536]{0}', space=vmem, size = 0x10000, scoped, tag = 'input window, operand 4, single buffered']
    #allocation6 [shape = 's32[1]{0}', space=sflag, size = 0x4, scoped, tag = 'scoped memory for vae_forward.1']
    #allocation7 [shape = 'u8[65536]{0}', space=vmem, size = 0x10000, scoped, tag = 'input window, operand 6, single buffered']
    #allocation8 [shape = 'u8[65536]{0}', space=vmem, size = 0x10000, scoped, tag = 'input window, operand 9, single buffered']
    #allocation9 [shape = 's32[1]{0}', space=sflag, size = 0x4, scoped, tag = 'scoped memory for vae_forward.1']
    #allocation10 [shape = 'u8[262144]{0}', space=vmem, size = 0x40000, scoped, tag = 'input window, operand 10, single buffered']
    #allocation11 [shape = 'u8[131072]{0}', space=vmem, size = 0x20000, scoped, tag = 'input window, operand 11, single buffered']
    #allocation12 [shape = 's32[1]{0}', space=sflag, size = 0x4, scoped, tag = 'scoped memory for vae_forward.1']
    #allocation13 [shape = 'u8[4096]{0}', space=vmem, size = 0x1000, scoped, tag = 'output window, operand 0, single buffered']
    %20 = vsyncpa [#allocation3], 0
    %21 = vsyncpa [#allocation6], 0
    %22 = vsyncpa [#allocation9], 0
    %23 = vsyncpa [#allocation12], 0
    %24 = vsyncpa [#allocation4], 0
    // Predicated region
    $region2: #{vae_forward.1} parent=1 // pred_check
      _
    $region3: #{vae_forward.1} parent=1 // pred_check_branch
      %26 = sbr.rel (0) target = $region5
    $region4: #{vae_forward.1} parent=1 // pred_region
      _
    $region5: #{vae_forward.1} parent=1 // pred_fallthru
      _
    // Predicated region
    $region6: #{vae_forward.1} parent=1 // pred_check
      _
    $region7: #{vae_forward.1} parent=1 // pred_check_branch
      %28 = sbr.rel (0) target = $region9
    $region8: #{vae_forward.1} parent=1 // pred_region
      _
    $region9: #{vae_forward.1} parent=1 // pred_fallthru
      _
    // Predicated region
    $region10: #{vae_forward.1} parent=1 // pred_check
      _
    $region11: #{vae_forward.1} parent=1 // pred_check_branch
      %30 = sbr.rel (0) target = $region13
    $region12: #{vae_forward.1} parent=1 // pred_region
      _
    $region13: #{vae_forward.1} parent=1 // pred_fallthru
      _
    // Predicated region
    $region14: #{vae_forward.1} parent=1 // pred_check
      _
    $region15: #{vae_forward.1} parent=1 // pred_check_branch
      %32 = sbr.rel (0) target = $region17
    $region16: #{vae_forward.1} parent=1 // pred_region
      %s34 = ssub.s32 8192, 8192
      %35 = vsyncadd [#allocation3], %s34
      %s36 = sshll.u32 [#allocation2], 4
      %s37 = int_to_ptr.vmem [resolvable:$true] %s36
      %42 = dma.hbm_to_vmem [thread:$0]  %s3, 8192, %s37, [#allocation3], 128, 128, 8
    $region17: #{vae_forward.1} parent=1 // pred_fallthru
      _
    // Predicated region
    $region18: #{vae_forward.1} parent=1 // pred_check
      _
    $region19: #{vae_forward.1} parent=1 // pred_check_branch
      %44 = sbr.rel (0) target = $region21
    $region20: #{vae_forward.1} parent=1 // pred_region
      %s46 = ssub.s32 2048, 2048
      %47 = vsyncadd [#allocation6], %s46
      %s48 = sshll.u32 [#allocation5], 4
      %s49 = int_to_ptr.vmem [resolvable:$true] %s48
      %54 = dma.hbm_to_vmem [thread:$0]  %s4, 2048, %s49, [#allocation6], 64, 64, 4
    $region21: #{vae_forward.1} parent=1 // pred_fallthru
      _
    // Predicated region
    $region22: #{vae_forward.1} parent=1 // pred_check
      _
    $region23: #{vae_forward.1} parent=1 // pred_check_branch
      %56 = sbr.rel (0) target = $region25
    $region24: #{vae_forward.1} parent=1 // pred_region
      _
    $region25: #{vae_forward.1} parent=1 // pred_fallthru
      _
    // Predicated region
    $region26: #{vae_forward.1} parent=1 // pred_check
      _
    $region27: #{vae_forward.1} parent=1 // pred_check_branch
      %58 = sbr.rel (0) target = $region29
    $region28: #{vae_forward.1} parent=1 // pred_region
      %s60 = ssub.s32 2048, 2048
      %61 = vsyncadd [#allocation6], %s60
      %s62 = sshll.u32 [#allocation7], 4
      %s63 = int_to_ptr.vmem [resolvable:$true] %s62
      %68 = dma.hbm_to_vmem [thread:$0]  %s6, 2048, %s63, [#allocation6], 256, 256, 16
    $region29: #{vae_forward.1} parent=1 // pred_fallthru
      _
    // Predicated region
    $region30: #{vae_forward.1} parent=1 // pred_check
      _
    $region31: #{vae_forward.1} parent=1 // pred_check_branch
      %70 = sbr.rel (0) target = $region33
    $region32: #{vae_forward.1} parent=1 // pred_region
      _
    $region33: #{vae_forward.1} parent=1 // pred_fallthru
      _
    // Predicated region
    $region34: #{vae_forward.1} parent=1 // pred_check
      _
    $region35: #{vae_forward.1} parent=1 // pred_check_branch
      %72 = sbr.rel (0) target = $region37
    $region36: #{vae_forward.1} parent=1 // pred_region
      _
    $region37: #{vae_forward.1} parent=1 // pred_fallthru
      _
    // Predicated region
    $region38: #{vae_forward.1} parent=1 // pred_check
      _
    $region39: #{vae_forward.1} parent=1 // pred_check_branch
      %74 = sbr.rel (0) target = $region41
    $region40: #{vae_forward.1} parent=1 // pred_region
      %s76 = ssub.s32 2048, 2048
      %77 = vsyncadd [#allocation9], %s76
      %s78 = sshll.u32 [#allocation8], 4
      %s79 = int_to_ptr.vmem [resolvable:$true] %s78
      %84 = dma.hbm_to_vmem [thread:$0]  %s9, 2048, %s79, [#allocation9], 128, 128, 8
    $region41: #{vae_forward.1} parent=1 // pred_fallthru
      _
    // Predicated region
    $region42: #{vae_forward.1} parent=1 // pred_check
      _
    $region43: #{vae_forward.1} parent=1 // pred_check_branch
      %86 = sbr.rel (0) target = $region45
    $region44: #{vae_forward.1} parent=1 // pred_region
      %s88 = ssub.s32 8192, 8192
      %89 = vsyncadd [#allocation9], %s88
      %s90 = sshll.u32 [#allocation10], 4
      %s91 = int_to_ptr.vmem [resolvable:$true] %s90
      %96 = dma.hbm_to_vmem [thread:$0]  %s10, 8192, %s91, [#allocation9], 256, 256, 16
    $region45: #{vae_forward.1} parent=1 // pred_fallthru
      _
    // Predicated region
    $region46: #{vae_forward.1} parent=1 // pred_check
      _
    $region47: #{vae_forward.1} parent=1 // pred_check_branch
      %98 = sbr.rel (0) target = $region49
    $region48: #{vae_forward.1} parent=1 // pred_region
      %s100 = ssub.s32 4096, 4096
      %101 = vsyncadd [#allocation12], %s100
      %s102 = sshll.u32 [#allocation11], 4
      %s103 = int_to_ptr.vmem [resolvable:$true] %s102
      %108 = dma.hbm_to_vmem [thread:$0]  %s11, 4096, %s103, [#allocation12], 64, 64, 4
    $region49: #{vae_forward.1} parent=1 // pred_fallthru
      _
    // Predicated region
    $region50: #{vae_forward.1} parent=1 // pred_check
      _
    $region51: #{vae_forward.1} parent=1 // pred_check_branch
      %110 = sbr.rel (0) target = $region53
    $region52: #{vae_forward.1} parent=1 // pred_region
      _
    $region53: #{vae_forward.1} parent=1 // pred_fallthru
      _
    // Predicated region
    $region54: #{vae_forward.1} parent=1 // pred_check
      _
    $region55: #{vae_forward.1} parent=1 // pred_check_branch
      %112 = sbr.rel (0) target = $region57
    $region56: #{vae_forward.1} parent=1 // pred_region
      %113 = dma.done [#allocation3], 8192
    $region57: #{vae_forward.1} parent=1 // pred_fallthru
      _
    // Predicated region
    $region58: #{vae_forward.1} parent=1 // pred_check
      _
    $region59: #{vae_forward.1} parent=1 // pred_check_branch
      %115 = sbr.rel (0) target = $region61
    $region60: #{vae_forward.1} parent=1 // pred_region
      %116 = dma.done [#allocation6], 2048
    $region61: #{vae_forward.1} parent=1 // pred_fallthru
      _
    // Predicated region
    $region62: #{vae_forward.1} parent=1 // pred_check
      _
    $region63: #{vae_forward.1} parent=1 // pred_check_branch
      %118 = sbr.rel (0) target = $region65
    $region64: #{vae_forward.1} parent=1 // pred_region
      %119 = dma.done [#allocation6], 2048
    $region65: #{vae_forward.1} parent=1 // pred_fallthru
      _
    // Predicated region
    $region66: #{vae_forward.1} parent=1 // pred_check
      _
    $region67: #{vae_forward.1} parent=1 // pred_check_branch
      %121 = sbr.rel (0) target = $region69
    $region68: #{vae_forward.1} parent=1 // pred_region
      %122 = dma.done [#allocation9], 2048
    $region69: #{vae_forward.1} parent=1 // pred_fallthru
      _
    // Predicated region
    $region70: #{vae_forward.1} parent=1 // pred_check
      _
    $region71: #{vae_forward.1} parent=1 // pred_check_branch
      %124 = sbr.rel (0) target = $region73
    $region72: #{vae_forward.1} parent=1 // pred_region
      %125 = dma.done [#allocation9], 8192
    $region73: #{vae_forward.1} parent=1 // pred_fallthru
      _
    // Predicated region
    $region74: #{vae_forward.1} parent=1 // pred_check
      _
    $region75: #{vae_forward.1} parent=1 // pred_check_branch
      %127 = sbr.rel (0) target = $region77
    $region76: #{vae_forward.1} parent=1 // pred_region
      %128 = dma.done [#allocation12], 4096
    $region77: #{vae_forward.1} parent=1 // pred_fallthru
      _
    %v130 = vld [vmem:[%s0] sm:$0xf]
    %v131 = vld [vmem:[%s2] sm:$0xff]
    %v132 = vld [vmem:[%s2 + $0x8] sm:$0xff]
    %v133 = vld [vmem:[%s2 + $0x10] sm:$0xff]
    %v134 = vld [vmem:[%s2 + $0x18] sm:$0xff]
    %v135 = vld [vmem:[%s2 + $0x20] sm:$0xff]
    %v136 = vld [vmem:[%s2 + $0x28] sm:$0xff]
    %v137 = vld [vmem:[%s2 + $0x30] sm:$0xff]
    %v138 = vld [vmem:[%s2 + $0x38] sm:$0xff]
    %v139 = vld [vmem:[%s2 + $0x40] sm:$0xff]
    %v140 = vld [vmem:[%s2 + $0x48] sm:$0xff]
    %v141 = vld [vmem:[%s2 + $0x50] sm:$0xff]
    %v142 = vld [vmem:[%s2 + $0x58] sm:$0xff]
    %v143 = vld [vmem:[%s2 + $0x60] sm:$0xff]
    %v144 = vld [vmem:[%s2 + $0x68] sm:$0xff]
    %v145 = vld [vmem:[%s2 + $0x70] sm:$0xff]
    %v146 = vld [vmem:[%s2 + $0x78] sm:$0xff]
    %v147 = vld [vmem:[%s2 + $0x80] sm:$0xff]
    %v148 = vld [vmem:[%s2 + $0x88] sm:$0xff]
    %v149 = vld [vmem:[%s2 + $0x90] sm:$0xff]
    %v150 = vld [vmem:[%s2 + $0x98] sm:$0xff]
    %v151 = vld [vmem:[%s2 + $0xa0] sm:$0xff]
    %v152 = vld [vmem:[%s2 + $0xa8] sm:$0xff]
    %v153 = vld [vmem:[%s2 + $0xb0] sm:$0xff]
    %v154 = vld [vmem:[%s2 + $0xb8] sm:$0xff]
    %v155 = vld [vmem:[%s2 + $0xc0] sm:$0xff]
    %v156 = vld [vmem:[%s2 + $0xc8] sm:$0xff]
    %v157 = vld [vmem:[%s2 + $0xd0] sm:$0xff]
    %v158 = vld [vmem:[%s2 + $0xd8] sm:$0xff]
    %v159 = vld [vmem:[%s2 + $0xe0] sm:$0xff]
    %v160 = vld [vmem:[%s2 + $0xe8] sm:$0xff]
    %v161 = vld [vmem:[%s2 + $0xf0] sm:$0xff]
    %v162 = vld [vmem:[%s2 + $0xf8] sm:$0xff]
    %v163 = vld [vmem:[%s12] sm:$0xf]
    %v165 = vlaneseq
    %v166 = vshrl.u32 %v165, 7
    %v167 = vsub.s32 0, %v166
    %v168 = vrot.slane %v163, %v167
    %v169 = vlaneseq
    %v170 = vshrl.u32 %v169, 7
    %v171 = vsub.s32 1, %v170
    %v172 = vrot.slane %v163, %v171
    %v173 = vlaneseq
    %v174 = vshrl.u32 %v173, 7
    %v175 = vsub.s32 2, %v174
    %v176 = vrot.slane %v163, %v175
    %v177 = vlaneseq
    %v178 = vshrl.u32 %v177, 7
    %v179 = vsub.s32 3, %v178
    %v180 = vrot.slane %v163, %v179
    %v217 = vunpack.c.l.b16 %v131
    %v218 = vunpack.c.h.b16 %v131
    %v219 = vunpack.c.l.b16 %v132
    %v220 = vunpack.c.h.b16 %v132
    %v221 = vunpack.c.l.b16 %v133
    %v222 = vunpack.c.h.b16 %v133
    %v223 = vunpack.c.l.b16 %v134
    %v224 = vunpack.c.h.b16 %v134
    %v225 = vunpack.c.l.b16 %v135
    %v226 = vunpack.c.h.b16 %v135
    %v227 = vunpack.c.l.b16 %v136
    %v228 = vunpack.c.h.b16 %v136
    %v229 = vunpack.c.l.b16 %v137
    %v230 = vunpack.c.h.b16 %v137
    %v231 = vunpack.c.l.b16 %v138
    %v232 = vunpack.c.h.b16 %v138
    %v233 = vunpack.c.l.b16 %v139
    %v234 = vunpack.c.h.b16 %v139
    %v235 = vunpack.c.l.b16 %v140
    %v236 = vunpack.c.h.b16 %v140
    %v237 = vunpack.c.l.b16 %v141
    %v238 = vunpack.c.h.b16 %v141
    %v239 = vunpack.c.l.b16 %v142
    %v240 = vunpack.c.h.b16 %v142
    %v241 = vunpack.c.l.b16 %v143
    %v242 = vunpack.c.h.b16 %v143
    %v243 = vunpack.c.l.b16 %v144
    %v244 = vunpack.c.h.b16 %v144
    %v245 = vunpack.c.l.b16 %v145
    %v246 = vunpack.c.h.b16 %v145
    %v247 = vunpack.c.l.b16 %v146
    %v248 = vunpack.c.h.b16 %v146
    %v249 = vunpack.c.l.b16 %v147
    %v250 = vunpack.c.h.b16 %v147
    %v251 = vunpack.c.l.b16 %v148
    %v252 = vunpack.c.h.b16 %v148
    %v253 = vunpack.c.l.b16 %v149
    %v254 = vunpack.c.h.b16 %v149
    %v255 = vunpack.c.l.b16 %v150
    %v256 = vunpack.c.h.b16 %v150
    %v257 = vunpack.c.l.b16 %v151
    %v258 = vunpack.c.h.b16 %v151
    %v259 = vunpack.c.l.b16 %v152
    %v260 = vunpack.c.h.b16 %v152
    %v261 = vunpack.c.l.b16 %v153
    %v262 = vunpack.c.h.b16 %v153
    %v263 = vunpack.c.l.b16 %v154
    %v264 = vunpack.c.h.b16 %v154
    %v265 = vunpack.c.l.b16 %v155
    %v266 = vunpack.c.h.b16 %v155
    %v267 = vunpack.c.l.b16 %v156
    %v268 = vunpack.c.h.b16 %v156
    %v269 = vunpack.c.l.b16 %v157
    %v270 = vunpack.c.h.b16 %v157
    %v271 = vunpack.c.l.b16 %v158
    %v272 = vunpack.c.h.b16 %v158
    %v273 = vunpack.c.l.b16 %v159
    %v274 = vunpack.c.h.b16 %v159
    %v275 = vunpack.c.l.b16 %v160
    %v276 = vunpack.c.h.b16 %v160
    %v277 = vunpack.c.l.b16 %v161
    %v278 = vunpack.c.h.b16 %v161
    %v279 = vunpack.c.l.b16 %v162
    %v280 = vunpack.c.h.b16 %v162
    %v281 = vpack.c.b16 %v221, %v217
    %v282 = vpack.c.b16 %v222, %v218
    %v283 = vpack.c.b16 %v223, %v219
    %v284 = vpack.c.b16 %v224, %v220
    %v285 = vpack.c.b16 %v229, %v225
    %v286 = vpack.c.b16 %v230, %v226
    %v287 = vpack.c.b16 %v231, %v227
    %v288 = vpack.c.b16 %v232, %v228
    %v289 = vpack.c.b16 %v237, %v233
    %v290 = vpack.c.b16 %v238, %v234
    %v291 = vpack.c.b16 %v239, %v235
    %v292 = vpack.c.b16 %v240, %v236
    %v293 = vpack.c.b16 %v245, %v241
    %v294 = vpack.c.b16 %v246, %v242
    %v295 = vpack.c.b16 %v247, %v243
    %v296 = vpack.c.b16 %v248, %v244
    %v297 = vpack.c.b16 %v253, %v249
    %v298 = vpack.c.b16 %v254, %v250
    %v299 = vpack.c.b16 %v255, %v251
    %v300 = vpack.c.b16 %v256, %v252
    %v301 = vpack.c.b16 %v261, %v257
    %v302 = vpack.c.b16 %v262, %v258
    %v303 = vpack.c.b16 %v263, %v259
    %v304 = vpack.c.b16 %v264, %v260
    %v305 = vpack.c.b16 %v269, %v265
    %v306 = vpack.c.b16 %v270, %v266
    %v307 = vpack.c.b16 %v271, %v267
    %v308 = vpack.c.b16 %v272, %v268
    %v309 = vpack.c.b16 %v277, %v273
    %v310 = vpack.c.b16 %v278, %v274
    %v311 = vpack.c.b16 %v279, %v275
    %v312 = vpack.c.b16 %v280, %v276
    %345 = vmatprep.subr.bf16.mxu0 %v282
    %346 = vmatpush1.bf16.msra.mxu0 %v281
    %347 = vmatprep.subr.bf16.mxu0 %v286
    %348 = vmatpush1.bf16.msra.mxu0 %v285
    %349 = vmatprep.subr.bf16.mxu0 %v290
    %350 = vmatpush1.bf16.msra.mxu0 %v289
    %351 = vmatprep.subr.bf16.mxu0 %v294
    %352 = vmatpush1.bf16.msra.mxu0 %v293
    %353 = vmatprep.subr.bf16.mxu0 %v298
    %354 = vmatpush1.bf16.msra.mxu0 %v297
    %355 = vmatprep.subr.bf16.mxu0 %v302
    %356 = vmatpush1.bf16.msra.mxu0 %v301
    %357 = vmatprep.subr.bf16.mxu0 %v306
    %358 = vmatpush1.bf16.msra.mxu0 %v305
    %359 = vmatprep.subr.bf16.mxu0 %v310
    %360 = vmatpush1.bf16.msra.mxu0 %v309
    %361 = vmatprep.subr.bf16.mxu0 0
    %362 = vmatpush1.bf16.msra.mxu0 0
    %363 = vmatprep.subr.bf16.mxu0 0
    %364 = vmatpush1.bf16.msra.mxu0 0
    %365 = vmatprep.subr.bf16.mxu0 0
    %366 = vmatpush1.bf16.msra.mxu0 0
    %367 = vmatprep.subr.bf16.mxu0 0
    %368 = vmatpush1.bf16.msra.mxu0 0
    %369 = vmatprep.subr.bf16.mxu0 0
    %370 = vmatpush1.bf16.msra.mxu0 0
    %371 = vmatprep.subr.bf16.mxu0 0
    %372 = vmatpush1.bf16.msra.mxu0 0
    %373 = vmatprep.subr.bf16.mxu0 0
    %374 = vmatpush1.bf16.msra.mxu0 0
    %375 = vmatprep.subr.bf16.mxu0 0
    %376 = vmatpush1.bf16.msra.mxu0 0
    %377 = vmatprep.mubr.bf16.mxu0 0
    %378 = vmatmul.mubr.bf16.gmra.mrb[0].mxu0 %v130
    %v379 = vpop.f32.mrb[0].mxu0
    %v380 = vadd.f32 %v168, %v379
    %v381 = vpop.f32.mrb[0].mxu0
    %v382 = vadd.f32 %v172, %v381
    %v383 = vpop.f32.mrb[0].mxu0
    %v384 = vpop.f32.mrb[0].mxu0
    %385 = vdwg.mxu0
    %386 = vmatprep.subr.bf16.mxu0 %v284
    %387 = vmatpush1.bf16.msra.mxu0 %v283
    %388 = vmatprep.subr.bf16.mxu0 %v288
    %389 = vmatpush1.bf16.msra.mxu0 %v287
    %390 = vmatprep.subr.bf16.mxu0 %v292
    %391 = vmatpush1.bf16.msra.mxu0 %v291
    %392 = vmatprep.subr.bf16.mxu0 %v296
    %393 = vmatpush1.bf16.msra.mxu0 %v295
    %394 = vmatprep.subr.bf16.mxu0 %v300
    %395 = vmatpush1.bf16.msra.mxu0 %v299
    %396 = vmatprep.subr.bf16.mxu0 %v304
    %397 = vmatpush1.bf16.msra.mxu0 %v303
    %398 = vmatprep.subr.bf16.mxu0 %v308
    %399 = vmatpush1.bf16.msra.mxu0 %v307
    %400 = vmatprep.subr.bf16.mxu0 %v312
    %401 = vmatpush1.bf16.msra.mxu0 %v311
    %402 = vmatprep.subr.bf16.mxu0 0
    %403 = vmatpush1.bf16.msra.mxu0 0
    %404 = vmatprep.subr.bf16.mxu0 0
    %405 = vmatpush1.bf16.msra.mxu0 0
    %406 = vmatprep.subr.bf16.mxu0 0
    %407 = vmatpush1.bf16.msra.mxu0 0
    %408 = vmatprep.subr.bf16.mxu0 0
    %409 = vmatpush1.bf16.msra.mxu0 0
    %410 = vmatprep.subr.bf16.mxu0 0
    %411 = vmatpush1.bf16.msra.mxu0 0
    %412 = vmatprep.subr.bf16.mxu0 0
    %413 = vmatpush1.bf16.msra.mxu0 0
    %414 = vmatprep.subr.bf16.mxu0 0
    %415 = vmatpush1.bf16.msra.mxu0 0
    %416 = vmatprep.subr.bf16.mxu0 0
    %417 = vmatpush1.bf16.msra.mxu0 0
    %418 = vmatprep.mubr.bf16.mxu0 0
    %419 = vmatmul.mubr.bf16.gmra.mrb[0].mxu0 %v130
    %v420 = vpop.f32.mrb[0].mxu0
    %v421 = vadd.f32 %v176, %v420
    %v422 = vpop.f32.mrb[0].mxu0
    %v423 = vadd.f32 %v180, %v422
    %v424 = vpop.f32.mrb[0].mxu0
    %v425 = vpop.f32.mrb[0].mxu0
    %426 = vdwg.mxu0
    %v427 = vmax.f32 %v380, 0.0
    %v428 = vmax.f32 %v382, 0.0
    %v429 = vmax.f32 %v421, 0.0
    %v430 = vmax.f32 %v423, 0.0
    %v431 = vpack.c.bf16 %v427, %v427
    %v432 = vpack.c.bf16 %v428, %v428
    %v433 = vpack.c.bf16 %v429, %v429
    %v434 = vpack.c.bf16 %v430, %v430
    %v435 = vld [vmem:[#allocation2] sm:$0xff]
    %v436 = vld [vmem:[#allocation2 + $0x8] sm:$0xff]
    %v437 = vld [vmem:[#allocation2 + $0x10] sm:$0xff]
    %v438 = vld [vmem:[#allocation2 + $0x18] sm:$0xff]
    %v439 = vld [vmem:[#allocation2 + $0x20] sm:$0xff]
    %v440 = vld [vmem:[#allocation2 + $0x28] sm:$0xff]
    %v441 = vld [vmem:[#allocation2 + $0x30] sm:$0xff]
    %v442 = vld [vmem:[#allocation2 + $0x38] sm:$0xff]
    %v443 = vld [vmem:[#allocation2 + $0x40] sm:$0xff]
    %v444 = vld [vmem:[#allocation2 + $0x48] sm:$0xff]
    %v445 = vld [vmem:[#allocation2 + $0x50] sm:$0xff]
    %v446 = vld [vmem:[#allocation2 + $0x58] sm:$0xff]
    %v447 = vld [vmem:[#allocation2 + $0x60] sm:$0xff]
    %v448 = vld [vmem:[#allocation2 + $0x68] sm:$0xff]
    %v449 = vld [vmem:[#allocation2 + $0x70] sm:$0xff]
    %v450 = vld [vmem:[#allocation2 + $0x78] sm:$0xff]
    %v451 = vld [vmem:[#allocation2 + $0x80] sm:$0xff]
    %v452 = vld [vmem:[#allocation2 + $0x88] sm:$0xff]
    %v453 = vld [vmem:[#allocation2 + $0x90] sm:$0xff]
    %v454 = vld [vmem:[#allocation2 + $0x98] sm:$0xff]
    %v455 = vld [vmem:[#allocation2 + $0xa0] sm:$0xff]
    %v456 = vld [vmem:[#allocation2 + $0xa8] sm:$0xff]
    %v457 = vld [vmem:[#allocation2 + $0xb0] sm:$0xff]
    %v458 = vld [vmem:[#allocation2 + $0xb8] sm:$0xff]
    %v459 = vld [vmem:[#allocation2 + $0xc0] sm:$0xff]
    %v460 = vld [vmem:[#allocation2 + $0xc8] sm:$0xff]
    %v461 = vld [vmem:[#allocation2 + $0xd0] sm:$0xff]
    %v462 = vld [vmem:[#allocation2 + $0xd8] sm:$0xff]
    %v463 = vld [vmem:[#allocation2 + $0xe0] sm:$0xff]
    %v464 = vld [vmem:[#allocation2 + $0xe8] sm:$0xff]
    %v465 = vld [vmem:[#allocation2 + $0xf0] sm:$0xff]
    %v466 = vld [vmem:[#allocation2 + $0xf8] sm:$0xff]
    %v467 = vld [vmem:[#allocation2 + $0x100] sm:$0xff]
    %v468 = vld [vmem:[#allocation2 + $0x108] sm:$0xff]
    %v469 = vld [vmem:[#allocation2 + $0x110] sm:$0xff]
    %v470 = vld [vmem:[#allocation2 + $0x118] sm:$0xff]
    %v471 = vld [vmem:[#allocation2 + $0x120] sm:$0xff]
    %v472 = vld [vmem:[#allocation2 + $0x128] sm:$0xff]
    %v473 = vld [vmem:[#allocation2 + $0x130] sm:$0xff]
    %v474 = vld [vmem:[#allocation2 + $0x138] sm:$0xff]
    %v475 = vld [vmem:[#allocation2 + $0x140] sm:$0xff]
    %v476 = vld [vmem:[#allocation2 + $0x148] sm:$0xff]
    %v477 = vld [vmem:[#allocation2 + $0x150] sm:$0xff]
    %v478 = vld [vmem:[#allocation2 + $0x158] sm:$0xff]
    %v479 = vld [vmem:[#allocation2 + $0x160] sm:$0xff]
    %v480 = vld [vmem:[#allocation2 + $0x168] sm:$0xff]
    %v481 = vld [vmem:[#allocation2 + $0x170] sm:$0xff]
    %v482 = vld [vmem:[#allocation2 + $0x178] sm:$0xff]
    %v483 = vld [vmem:[#allocation2 + $0x180] sm:$0xff]
    %v484 = vld [vmem:[#allocation2 + $0x188] sm:$0xff]
    %v485 = vld [vmem:[#allocation2 + $0x190] sm:$0xff]
    %v486 = vld [vmem:[#allocation2 + $0x198] sm:$0xff]
    %v487 = vld [vmem:[#allocation2 + $0x1a0] sm:$0xff]
    %v488 = vld [vmem:[#allocation2 + $0x1a8] sm:$0xff]
    %v489 = vld [vmem:[#allocation2 + $0x1b0] sm:$0xff]
    %v490 = vld [vmem:[#allocation2 + $0x1b8] sm:$0xff]
    %v491 = vld [vmem:[#allocation2 + $0x1c0] sm:$0xff]
    %v492 = vld [vmem:[#allocation2 + $0x1c8] sm:$0xff]
    %v493 = vld [vmem:[#allocation2 + $0x1d0] sm:$0xff]
    %v494 = vld [vmem:[#allocation2 + $0x1d8] sm:$0xff]
    %v495 = vld [vmem:[#allocation2 + $0x1e0] sm:$0xff]
    %v496 = vld [vmem:[#allocation2 + $0x1e8] sm:$0xff]
    %v497 = vld [vmem:[#allocation2 + $0x1f0] sm:$0xff]
    %v498 = vld [vmem:[#allocation2 + $0x1f8] sm:$0xff]
    %v499 = vld [vmem:[%s12 + $0x4] sm:$0x3]
    %v501 = vlaneseq
    %v502 = vshrl.u32 %v501, 7
    %v503 = vsub.s32 0, %v502
    %v504 = vrot.slane %v499, %v503
    %v505 = vlaneseq
    %v506 = vshrl.u32 %v505, 7
    %v507 = vsub.s32 1, %v506
    %v508 = vrot.slane %v499, %v507
    %v575 = vunpack.c.l.b16 %v435
    %v576 = vunpack.c.h.b16 %v435
    %v577 = vunpack.c.l.b16 %v436
    %v578 = vunpack.c.h.b16 %v436
    %v579 = vunpack.c.l.b16 %v437
    %v580 = vunpack.c.h.b16 %v437
    %v581 = vunpack.c.l.b16 %v438
    %v582 = vunpack.c.h.b16 %v438
    %v583 = vunpack.c.l.b16 %v439
    %v584 = vunpack.c.h.b16 %v439
    %v585 = vunpack.c.l.b16 %v440
    %v586 = vunpack.c.h.b16 %v440
    %v587 = vunpack.c.l.b16 %v441
    %v588 = vunpack.c.h.b16 %v441
    %v589 = vunpack.c.l.b16 %v442
    %v590 = vunpack.c.h.b16 %v442
    %v591 = vunpack.c.l.b16 %v443
    %v592 = vunpack.c.h.b16 %v443
    %v593 = vunpack.c.l.b16 %v444
    %v594 = vunpack.c.h.b16 %v444
    %v595 = vunpack.c.l.b16 %v445
    %v596 = vunpack.c.h.b16 %v445
    %v597 = vunpack.c.l.b16 %v446
    %v598 = vunpack.c.h.b16 %v446
    %v599 = vunpack.c.l.b16 %v447
    %v600 = vunpack.c.h.b16 %v447
    %v601 = vunpack.c.l.b16 %v448
    %v602 = vunpack.c.h.b16 %v448
    %v603 = vunpack.c.l.b16 %v449
    %v604 = vunpack.c.h.b16 %v449
    %v605 = vunpack.c.l.b16 %v450
    %v606 = vunpack.c.h.b16 %v450
    %v607 = vunpack.c.l.b16 %v451
    %v608 = vunpack.c.h.b16 %v451
    %v609 = vunpack.c.l.b16 %v452
    %v610 = vunpack.c.h.b16 %v452
    %v611 = vunpack.c.l.b16 %v453
    %v612 = vunpack.c.h.b16 %v453
    %v613 = vunpack.c.l.b16 %v454
    %v614 = vunpack.c.h.b16 %v454
    %v615 = vunpack.c.l.b16 %v455
    %v616 = vunpack.c.h.b16 %v455
    %v617 = vunpack.c.l.b16 %v456
    %v618 = vunpack.c.h.b16 %v456
    %v619 = vunpack.c.l.b16 %v457
    %v620 = vunpack.c.h.b16 %v457
    %v621 = vunpack.c.l.b16 %v458
    %v622 = vunpack.c.h.b16 %v458
    %v623 = vunpack.c.l.b16 %v459
    %v624 = vunpack.c.h.b16 %v459
    %v625 = vunpack.c.l.b16 %v460
    %v626 = vunpack.c.h.b16 %v460
    %v627 = vunpack.c.l.b16 %v461
    %v628 = vunpack.c.h.b16 %v461
    %v629 = vunpack.c.l.b16 %v462
    %v630 = vunpack.c.h.b16 %v462
    %v631 = vunpack.c.l.b16 %v463
    %v632 = vunpack.c.h.b16 %v463
    %v633 = vunpack.c.l.b16 %v464
    %v634 = vunpack.c.h.b16 %v464
    %v635 = vunpack.c.l.b16 %v465
    %v636 = vunpack.c.h.b16 %v465
    %v637 = vunpack.c.l.b16 %v466
    %v638 = vunpack.c.h.b16 %v466
    %v639 = vunpack.c.l.b16 %v467
    %v640 = vunpack.c.h.b16 %v467
    %v641 = vunpack.c.l.b16 %v468
    %v642 = vunpack.c.h.b16 %v468
    %v643 = vunpack.c.l.b16 %v469
    %v644 = vunpack.c.h.b16 %v469
    %v645 = vunpack.c.l.b16 %v470
    %v646 = vunpack.c.h.b16 %v470
    %v647 = vunpack.c.l.b16 %v471
    %v648 = vunpack.c.h.b16 %v471
    %v649 = vunpack.c.l.b16 %v472
    %v650 = vunpack.c.h.b16 %v472
    %v651 = vunpack.c.l.b16 %v473
    %v652 = vunpack.c.h.b16 %v473
    %v653 = vunpack.c.l.b16 %v474
    %v654 = vunpack.c.h.b16 %v474
    %v655 = vunpack.c.l.b16 %v475
    %v656 = vunpack.c.h.b16 %v475
    %v657 = vunpack.c.l.b16 %v476
    %v658 = vunpack.c.h.b16 %v476
    %v659 = vunpack.c.l.b16 %v477
    %v660 = vunpack.c.h.b16 %v477
    %v661 = vunpack.c.l.b16 %v478
    %v662 = vunpack.c.h.b16 %v478
    %v663 = vunpack.c.l.b16 %v479
    %v664 = vunpack.c.h.b16 %v479
    %v665 = vunpack.c.l.b16 %v480
    %v666 = vunpack.c.h.b16 %v480
    %v667 = vunpack.c.l.b16 %v481
    %v668 = vunpack.c.h.b16 %v481
    %v669 = vunpack.c.l.b16 %v482
    %v670 = vunpack.c.h.b16 %v482
    %v671 = vunpack.c.l.b16 %v483
    %v672 = vunpack.c.h.b16 %v483
    %v673 = vunpack.c.l.b16 %v484
    %v674 = vunpack.c.h.b16 %v484
    %v675 = vunpack.c.l.b16 %v485
    %v676 = vunpack.c.h.b16 %v485
    %v677 = vunpack.c.l.b16 %v486
    %v678 = vunpack.c.h.b16 %v486
    %v679 = vunpack.c.l.b16 %v487
    %v680 = vunpack.c.h.b16 %v487
    %v681 = vunpack.c.l.b16 %v488
    %v682 = vunpack.c.h.b16 %v488
    %v683 = vunpack.c.l.b16 %v489
    %v684 = vunpack.c.h.b16 %v489
    %v685 = vunpack.c.l.b16 %v490
    %v686 = vunpack.c.h.b16 %v490
    %v687 = vunpack.c.l.b16 %v491
    %v688 = vunpack.c.h.b16 %v491
    %v689 = vunpack.c.l.b16 %v492
    %v690 = vunpack.c.h.b16 %v492
    %v691 = vunpack.c.l.b16 %v493
    %v692 = vunpack.c.h.b16 %v493
    %v693 = vunpack.c.l.b16 %v494
    %v694 = vunpack.c.h.b16 %v494
    %v695 = vunpack.c.l.b16 %v495
    %v696 = vunpack.c.h.b16 %v495
    %v697 = vunpack.c.l.b16 %v496
    %v698 = vunpack.c.h.b16 %v496
    %v699 = vunpack.c.l.b16 %v497
    %v700 = vunpack.c.h.b16 %v497
    %v701 = vunpack.c.l.b16 %v498
    %v702 = vunpack.c.h.b16 %v498
    %v703 = vpack.c.b16 %v577, %v575
    %v704 = vpack.c.b16 %v578, %v576
    %v705 = vpack.c.b16 %v581, %v579
    %v706 = vpack.c.b16 %v582, %v580
    %v707 = vpack.c.b16 %v585, %v583
    %v708 = vpack.c.b16 %v586, %v584
    %v709 = vpack.c.b16 %v589, %v587
    %v710 = vpack.c.b16 %v590, %v588
    %v711 = vpack.c.b16 %v593, %v591
    %v712 = vpack.c.b16 %v594, %v592
    %v713 = vpack.c.b16 %v597, %v595
    %v714 = vpack.c.b16 %v598, %v596
    %v715 = vpack.c.b16 %v601, %v599
    %v716 = vpack.c.b16 %v602, %v600
    %v717 = vpack.c.b16 %v605, %v603
    %v718 = vpack.c.b16 %v606, %v604
    %v719 = vpack.c.b16 %v609, %v607
    %v720 = vpack.c.b16 %v610, %v608
    %v721 = vpack.c.b16 %v613, %v611
    %v722 = vpack.c.b16 %v614, %v612
    %v723 = vpack.c.b16 %v617, %v615
    %v724 = vpack.c.b16 %v618, %v616
    %v725 = vpack.c.b16 %v621, %v619
    %v726 = vpack.c.b16 %v622, %v620
    %v727 = vpack.c.b16 %v625, %v623
    %v728 = vpack.c.b16 %v626, %v624
    %v729 = vpack.c.b16 %v629, %v627
    %v730 = vpack.c.b16 %v630, %v628
    %v731 = vpack.c.b16 %v633, %v631
    %v732 = vpack.c.b16 %v634, %v632
    %v733 = vpack.c.b16 %v637, %v635
    %v734 = vpack.c.b16 %v638, %v636
    %v735 = vpack.c.b16 %v641, %v639
    %v736 = vpack.c.b16 %v642, %v640
    %v737 = vpack.c.b16 %v645, %v643
    %v738 = vpack.c.b16 %v646, %v644
    %v739 = vpack.c.b16 %v649, %v647
    %v740 = vpack.c.b16 %v650, %v648
    %v741 = vpack.c.b16 %v653, %v651
    %v742 = vpack.c.b16 %v654, %v652
    %v743 = vpack.c.b16 %v657, %v655
    %v744 = vpack.c.b16 %v658, %v656
    %v745 = vpack.c.b16 %v661, %v659
    %v746 = vpack.c.b16 %v662, %v660
    %v747 = vpack.c.b16 %v665, %v663
    %v748 = vpack.c.b16 %v666, %v664
    %v749 = vpack.c.b16 %v669, %v667
    %v750 = vpack.c.b16 %v670, %v668
    %v751 = vpack.c.b16 %v673, %v671
    %v752 = vpack.c.b16 %v674, %v672
    %v753 = vpack.c.b16 %v677, %v675
    %v754 = vpack.c.b16 %v678, %v676
    %v755 = vpack.c.b16 %v681, %v679
    %v756 = vpack.c.b16 %v682, %v680
    %v757 = vpack.c.b16 %v685, %v683
    %v758 = vpack.c.b16 %v686, %v684
    %v759 = vpack.c.b16 %v689, %v687
    %v760 = vpack.c.b16 %v690, %v688
    %v761 = vpack.c.b16 %v693, %v691
    %v762 = vpack.c.b16 %v694, %v692
    %v763 = vpack.c.b16 %v697, %v695
    %v764 = vpack.c.b16 %v698, %v696
    %v765 = vpack.c.b16 %v701, %v699
    %v766 = vpack.c.b16 %v702, %v700
    %831 = vmatprep.subr.bf16.mxu0 %v704
    %832 = vmatpush1.bf16.msra.mxu0 %v703
    %833 = vmatprep.subr.bf16.mxu0 %v706
    %834 = vmatpush1.bf16.msra.mxu0 %v705
    %835 = vmatprep.subr.bf16.mxu0 %v708
    %836 = vmatpush1.bf16.msra.mxu0 %v707
    %837 = vmatprep.subr.bf16.mxu0 %v710
    %838 = vmatpush1.bf16.msra.mxu0 %v709
    %839 = vmatprep.subr.bf16.mxu0 %v712
    %840 = vmatpush1.bf16.msra.mxu0 %v711
    %841 = vmatprep.subr.bf16.mxu0 %v714
    %842 = vmatpush1.bf16.msra.mxu0 %v713
    %843 = vmatprep.subr.bf16.mxu0 %v716
    %844 = vmatpush1.bf16.msra.mxu0 %v715
    %845 = vmatprep.subr.bf16.mxu0 %v718
    %846 = vmatpush1.bf16.msra.mxu0 %v717
    %847 = vmatprep.subr.bf16.mxu0 %v720
    %848 = vmatpush1.bf16.msra.mxu0 %v719
    %849 = vmatprep.subr.bf16.mxu0 %v722
    %850 = vmatpush1.bf16.msra.mxu0 %v721
    %851 = vmatprep.subr.bf16.mxu0 %v724
    %852 = vmatpush1.bf16.msra.mxu0 %v723
    %853 = vmatprep.subr.bf16.mxu0 %v726
    %854 = vmatpush1.bf16.msra.mxu0 %v725
    %855 = vmatprep.subr.bf16.mxu0 %v728
    %856 = vmatpush1.bf16.msra.mxu0 %v727
    %857 = vmatprep.subr.bf16.mxu0 %v730
    %858 = vmatpush1.bf16.msra.mxu0 %v729
    %859 = vmatprep.subr.bf16.mxu0 %v732
    %860 = vmatpush1.bf16.msra.mxu0 %v731
    %861 = vmatprep.subr.bf16.mxu0 %v734
    %862 = vmatpush1.bf16.msra.mxu0 %v733
    %863 = vmatprep.mubr.bf16.mxu0 %v432
    %864 = vmatmul.mubr.bf16.gmra.mrb[0].mxu0 %v431
    %v865 = vpop.f32.mrb[0].mxu0
    %v866 = vadd.f32 %v504, %v865
    %v867 = vpop.f32.mrb[0].mxu0
    %v868 = vadd.f32 %v508, %v867
    %v869 = vpop.f32.mrb[0].mxu0
    %v870 = vpop.f32.mrb[0].mxu0
    %871 = vdwg.mxu0
    %872 = vmatprep.subr.bf16.mxu0 %v736
    %873 = vmatpush1.bf16.msra.mxu0 %v735
    %874 = vmatprep.subr.bf16.mxu0 %v738
    %875 = vmatpush1.bf16.msra.mxu0 %v737
    %876 = vmatprep.subr.bf16.mxu0 %v740
    %877 = vmatpush1.bf16.msra.mxu0 %v739
    %878 = vmatprep.subr.bf16.mxu0 %v742
    %879 = vmatpush1.bf16.msra.mxu0 %v741
    %880 = vmatprep.subr.bf16.mxu0 %v744
    %881 = vmatpush1.bf16.msra.mxu0 %v743
    %882 = vmatprep.subr.bf16.mxu0 %v746
    %883 = vmatpush1.bf16.msra.mxu0 %v745
    %884 = vmatprep.subr.bf16.mxu0 %v748
    %885 = vmatpush1.bf16.msra.mxu0 %v747
    %886 = vmatprep.subr.bf16.mxu0 %v750
    %887 = vmatpush1.bf16.msra.mxu0 %v749
    %888 = vmatprep.subr.bf16.mxu0 %v752
    %889 = vmatpush1.bf16.msra.mxu0 %v751
    %890 = vmatprep.subr.bf16.mxu0 %v754
    %891 = vmatpush1.bf16.msra.mxu0 %v753
    %892 = vmatprep.subr.bf16.mxu0 %v756
    %893 = vmatpush1.bf16.msra.mxu0 %v755
    %894 = vmatprep.subr.bf16.mxu0 %v758
    %895 = vmatpush1.bf16.msra.mxu0 %v757
    %896 = vmatprep.subr.bf16.mxu0 %v760
    %897 = vmatpush1.bf16.msra.mxu0 %v759
    %898 = vmatprep.subr.bf16.mxu0 %v762
    %899 = vmatpush1.bf16.msra.mxu0 %v761
    %900 = vmatprep.subr.bf16.mxu0 %v764
    %901 = vmatpush1.bf16.msra.mxu0 %v763
    %902 = vmatprep.subr.bf16.mxu0 %v766
    %903 = vmatpush1.bf16.msra.mxu0 %v765
    %904 = vmatprep.mubr.bf16.mxu0 %v434
    %905 = vmatmul.mubr.bf16.gmra.mrb[0].mxu0 %v433
    %v906 = vpop.f32.mrb[0].mxu0
    %v907 = vadd.f32 %v866, %v906
    %v908 = vpop.f32.mrb[0].mxu0
    %v909 = vadd.f32 %v868, %v908
    %v910 = vpop.f32.mrb[0].mxu0
    %v911 = vpop.f32.mrb[0].mxu0
    %912 = vdwg.mxu0
    %v913 = vmax.f32 %v907, 0.0
    %v914 = vmax.f32 %v909, 0.0
    %v915 = vpack.c.bf16 %v913, %v913
    %v916 = vpack.c.bf16 %v914, %v914
    %v917 = vld [vmem:[#allocation5] sm:$0xf]
    %v918 = vld [vmem:[#allocation5 + $0x4] sm:$0xf]
    %v919 = vld [vmem:[#allocation5 + $0x8] sm:$0xf]
    %v920 = vld [vmem:[#allocation5 + $0xc] sm:$0xf]
    %v921 = vld [vmem:[#allocation5 + $0x10] sm:$0xf]
    %v922 = vld [vmem:[#allocation5 + $0x14] sm:$0xf]
    %v923 = vld [vmem:[#allocation5 + $0x18] sm:$0xf]
    %v924 = vld [vmem:[#allocation5 + $0x1c] sm:$0xf]
    %v925 = vld [vmem:[#allocation5 + $0x20] sm:$0xf]
    %v926 = vld [vmem:[#allocation5 + $0x24] sm:$0xf]
    %v927 = vld [vmem:[#allocation5 + $0x28] sm:$0xf]
    %v928 = vld [vmem:[#allocation5 + $0x2c] sm:$0xf]
    %v929 = vld [vmem:[#allocation5 + $0x30] sm:$0xf]
    %v930 = vld [vmem:[#allocation5 + $0x34] sm:$0xf]
    %v931 = vld [vmem:[#allocation5 + $0x38] sm:$0xf]
    %v932 = vld [vmem:[#allocation5 + $0x3c] sm:$0xf]
    %v933 = vld [vmem:[#allocation5 + $0x40] sm:$0xf]
    %v934 = vld [vmem:[#allocation5 + $0x44] sm:$0xf]
    %v935 = vld [vmem:[#allocation5 + $0x48] sm:$0xf]
    %v936 = vld [vmem:[#allocation5 + $0x4c] sm:$0xf]
    %v937 = vld [vmem:[#allocation5 + $0x50] sm:$0xf]
    %v938 = vld [vmem:[#allocation5 + $0x54] sm:$0xf]
    %v939 = vld [vmem:[#allocation5 + $0x58] sm:$0xf]
    %v940 = vld [vmem:[#allocation5 + $0x5c] sm:$0xf]
    %v941 = vld [vmem:[#allocation5 + $0x60] sm:$0xf]
    %v942 = vld [vmem:[#allocation5 + $0x64] sm:$0xf]
    %v943 = vld [vmem:[#allocation5 + $0x68] sm:$0xf]
    %v944 = vld [vmem:[#allocation5 + $0x6c] sm:$0xf]
    %v945 = vld [vmem:[#allocation5 + $0x70] sm:$0xf]
    %v946 = vld [vmem:[#allocation5 + $0x74] sm:$0xf]
    %v947 = vld [vmem:[#allocation5 + $0x78] sm:$0xf]
    %v948 = vld [vmem:[#allocation5 + $0x7c] sm:$0xf]
    %v949 = vld [vmem:[%s12 + $0x6] sm:$0x1]
    %v951 = vlaneseq
    %v952 = vshrl.u32 %v951, 7
    %v953 = vsub.s32 0, %v952
    %v954 = vrot.slane %v949, %v953
    %v988 = vunpack.c.l.b16 %v917
    %v989 = vunpack.c.l.b16 %v918
    %v990 = vunpack.c.l.b16 %v919
    %v991 = vunpack.c.l.b16 %v920
    %v992 = vunpack.c.l.b16 %v921
    %v993 = vunpack.c.l.b16 %v922
    %v994 = vunpack.c.l.b16 %v923
    %v995 = vunpack.c.l.b16 %v924
    %v996 = vunpack.c.l.b16 %v925
    %v997 = vunpack.c.l.b16 %v926
    %v998 = vunpack.c.l.b16 %v927
    %v999 = vunpack.c.l.b16 %v928
    %v1000 = vunpack.c.l.b16 %v929
    %v1001 = vunpack.c.l.b16 %v930
    %v1002 = vunpack.c.l.b16 %v931
    %v1003 = vunpack.c.l.b16 %v932
    %v1004 = vunpack.c.l.b16 %v933
    %v1005 = vunpack.c.l.b16 %v934
    %v1006 = vunpack.c.l.b16 %v935
    %v1007 = vunpack.c.l.b16 %v936
    %v1008 = vunpack.c.l.b16 %v937
    %v1009 = vunpack.c.l.b16 %v938
    %v1010 = vunpack.c.l.b16 %v939
    %v1011 = vunpack.c.l.b16 %v940
    %v1012 = vunpack.c.l.b16 %v941
    %v1013 = vunpack.c.l.b16 %v942
    %v1014 = vunpack.c.l.b16 %v943
    %v1015 = vunpack.c.l.b16 %v944
    %v1016 = vunpack.c.l.b16 %v945
    %v1017 = vunpack.c.l.b16 %v946
    %v1018 = vunpack.c.l.b16 %v947
    %v1019 = vunpack.c.l.b16 %v948
    %v1020 = vpack.c.b16 %v989, %v988
    %v1021 = vpack.c.b16 %v991, %v990
    %v1022 = vpack.c.b16 %v993, %v992
    %v1023 = vpack.c.b16 %v995, %v994
    %v1024 = vpack.c.b16 %v997, %v996
    %v1025 = vpack.c.b16 %v999, %v998
    %v1026 = vpack.c.b16 %v1001, %v1000
    %v1027 = vpack.c.b16 %v1003, %v1002
    %v1028 = vpack.c.b16 %v1005, %v1004
    %v1029 = vpack.c.b16 %v1007, %v1006
    %v1030 = vpack.c.b16 %v1009, %v1008
    %v1031 = vpack.c.b16 %v1011, %v1010
    %v1032 = vpack.c.b16 %v1013, %v1012
    %v1033 = vpack.c.b16 %v1015, %v1014
    %v1034 = vpack.c.b16 %v1017, %v1016
    %v1035 = vpack.c.b16 %v1019, %v1018
    %1052 = vmatprep.subr.bf16.mxu0 0
    %1053 = vmatpush1.bf16.msra.mxu0 %v1020
    %1054 = vmatprep.subr.bf16.mxu0 0
    %1055 = vmatpush1.bf16.msra.mxu0 %v1021
    %1056 = vmatprep.subr.bf16.mxu0 0
    %1057 = vmatpush1.bf16.msra.mxu0 %v1022
    %1058 = vmatprep.subr.bf16.mxu0 0
    %1059 = vmatpush1.bf16.msra.mxu0 %v1023
    %1060 = vmatprep.subr.bf16.mxu0 0
    %1061 = vmatpush1.bf16.msra.mxu0 %v1024
    %1062 = vmatprep.subr.bf16.mxu0 0
    %1063 = vmatpush1.bf16.msra.mxu0 %v1025
    %1064 = vmatprep.subr.bf16.mxu0 0
    %1065 = vmatpush1.bf16.msra.mxu0 %v1026
    %1066 = vmatprep.subr.bf16.mxu0 0
    %1067 = vmatpush1.bf16.msra.mxu0 %v1027
    %1068 = vmatprep.subr.bf16.mxu0 0
    %1069 = vmatpush1.bf16.msra.mxu0 %v1028
    %1070 = vmatprep.subr.bf16.mxu0 0
    %1071 = vmatpush1.bf16.msra.mxu0 %v1029
    %1072 = vmatprep.subr.bf16.mxu0 0
    %1073 = vmatpush1.bf16.msra.mxu0 %v1030
    %1074 = vmatprep.subr.bf16.mxu0 0
    %1075 = vmatpush1.bf16.msra.mxu0 %v1031
    %1076 = vmatprep.subr.bf16.mxu0 0
    %1077 = vmatpush1.bf16.msra.mxu0 %v1032
    %1078 = vmatprep.subr.bf16.mxu0 0
    %1079 = vmatpush1.bf16.msra.mxu0 %v1033
    %1080 = vmatprep.subr.bf16.mxu0 0
    %1081 = vmatpush1.bf16.msra.mxu0 %v1034
    %1082 = vmatprep.subr.bf16.mxu0 0
    %1083 = vmatpush1.bf16.msra.mxu0 %v1035
    %1084 = vmatprep.mubr.bf16.mxu0 %v916
    %1085 = vmatmul.mubr.bf16.gmra.mrb[0].mxu0 %v915
    %v1086 = vpop.f32.mrb[0].mxu0
    %v1087 = vadd.f32 %v954, %v1086
    %v1088 = vpop.f32.mrb[0].mxu0
    %v1089 = vpop.f32.mrb[0].mxu0
    %v1090 = vpop.f32.mrb[0].mxu0
    %1091 = vdwg.mxu0
    %v1092 = vmax.f32 %v1087, 0.0
    %v1093 = vpack.c.bf16 %v1092, %v1092
    %v1094 = vld [vmem:[%s5] sm:$0xf]
    %v1095 = vld [vmem:[%s5 + $0x4] sm:$0xf]
    %v1096 = vld [vmem:[%s5 + $0x8] sm:$0xf]
    %v1097 = vld [vmem:[%s5 + $0xc] sm:$0xf]
    %v1098 = vld [vmem:[%s5 + $0x10] sm:$0xf]
    %v1099 = vld [vmem:[%s5 + $0x14] sm:$0xf]
    %v1100 = vld [vmem:[%s5 + $0x18] sm:$0xf]
    %v1101 = vld [vmem:[%s5 + $0x1c] sm:$0xf]
    %v1102 = vld [vmem:[%s5 + $0x20] sm:$0xf]
    %v1103 = vld [vmem:[%s5 + $0x24] sm:$0xf]
    %v1104 = vld [vmem:[%s5 + $0x28] sm:$0xf]
    %v1105 = vld [vmem:[%s5 + $0x2c] sm:$0xf]
    %v1106 = vld [vmem:[%s5 + $0x30] sm:$0xf]
    %v1107 = vld [vmem:[%s5 + $0x34] sm:$0xf]
    %v1108 = vld [vmem:[%s5 + $0x38] sm:$0xf]
    %v1109 = vld [vmem:[%s5 + $0x3c] sm:$0xf]
    %v1110 = vld [vmem:[%s12 + $0x7] sm:$0x1]
    %v1112 = vlaneseq
    %v1113 = vshrl.u32 %v1112, 7
    %v1114 = vsub.s32 0, %v1113
    %v1115 = vrot.slane %v1110, %v1114
    %v1133 = vunpack.c.l.b16 %v1094
    %v1134 = vunpack.c.l.b16 %v1095
    %v1135 = vunpack.c.l.b16 %v1096
    %v1136 = vunpack.c.l.b16 %v1097
    %v1137 = vunpack.c.l.b16 %v1098
    %v1138 = vunpack.c.l.b16 %v1099
    %v1139 = vunpack.c.l.b16 %v1100
    %v1140 = vunpack.c.l.b16 %v1101
    %v1141 = vunpack.c.l.b16 %v1102
    %v1142 = vunpack.c.l.b16 %v1103
    %v1143 = vunpack.c.l.b16 %v1104
    %v1144 = vunpack.c.l.b16 %v1105
    %v1145 = vunpack.c.l.b16 %v1106
    %v1146 = vunpack.c.l.b16 %v1107
    %v1147 = vunpack.c.l.b16 %v1108
    %v1148 = vunpack.c.l.b16 %v1109
    %v1149 = vpack.c.b16 %v1134, %v1133
    %v1150 = vpack.c.b16 %v1136, %v1135
    %v1151 = vpack.c.b16 %v1138, %v1137
    %v1152 = vpack.c.b16 %v1140, %v1139
    %v1153 = vpack.c.b16 %v1142, %v1141
    %v1154 = vpack.c.b16 %v1144, %v1143
    %v1155 = vpack.c.b16 %v1146, %v1145
    %v1156 = vpack.c.b16 %v1148, %v1147
    %1165 = vmatprep.subr.bf16.mxu0 0
    %1166 = vmatpush1.bf16.msra.mxu0 %v1149
    %1167 = vmatprep.subr.bf16.mxu0 0
    %1168 = vmatpush1.bf16.msra.mxu0 %v1150
    %1169 = vmatprep.subr.bf16.mxu0 0
    %1170 = vmatpush1.bf16.msra.mxu0 %v1151
    %1171 = vmatprep.subr.bf16.mxu0 0
    %1172 = vmatpush1.bf16.msra.mxu0 %v1152
    %1173 = vmatprep.subr.bf16.mxu0 0
    %1174 = vmatpush1.bf16.msra.mxu0 %v1153
    %1175 = vmatprep.subr.bf16.mxu0 0
    %1176 = vmatpush1.bf16.msra.mxu0 %v1154
    %1177 = vmatprep.subr.bf16.mxu0 0
    %1178 = vmatpush1.bf16.msra.mxu0 %v1155
    %1179 = vmatprep.subr.bf16.mxu0 0
    %1180 = vmatpush1.bf16.msra.mxu0 %v1156
    %1181 = vmatprep.subr.bf16.mxu0 0
    %1182 = vmatpush1.bf16.msra.mxu0 0
    %1183 = vmatprep.subr.bf16.mxu0 0
    %1184 = vmatpush1.bf16.msra.mxu0 0
    %1185 = vmatprep.subr.bf16.mxu0 0
    %1186 = vmatpush1.bf16.msra.mxu0 0
    %1187 = vmatprep.subr.bf16.mxu0 0
    %1188 = vmatpush1.bf16.msra.mxu0 0
    %1189 = vmatprep.subr.bf16.mxu0 0
    %1190 = vmatpush1.bf16.msra.mxu0 0
    %1191 = vmatprep.subr.bf16.mxu0 0
    %1192 = vmatpush1.bf16.msra.mxu0 0
    %1193 = vmatprep.subr.bf16.mxu0 0
    %1194 = vmatpush1.bf16.msra.mxu0 0
    %1195 = vmatprep.subr.bf16.mxu0 0
    %1196 = vmatpush1.bf16.msra.mxu0 0
    %1197 = vmatprep.mubr.bf16.mxu0 0
    %1198 = vmatmul.mubr.bf16.gmra.mrb[0].mxu0 %v1093
    %v1199 = vpop.f32.mrb[0].mxu0
    %v1200 = vadd.f32 %v1115, %v1199
    %v1201 = vpop.f32.mrb[0].mxu0
    %v1202 = vpop.f32.mrb[0].mxu0
    %v1203 = vpop.f32.mrb[0].mxu0
    %1204 = vdwg.mxu0
    %v1205 = vmax.f32 %v1200, 0.0
    %v1206 = vpack.c.bf16 %v1205, %v1205
    %v1207 = vld [vmem:[#allocation7] sm:$0xff]
    %v1208 = vld [vmem:[#allocation7 + $0x8] sm:$0xff]
    %v1209 = vld [vmem:[#allocation7 + $0x10] sm:$0xff]
    %v1210 = vld [vmem:[#allocation7 + $0x18] sm:$0xff]
    %v1211 = vld [vmem:[#allocation7 + $0x20] sm:$0xff]
    %v1212 = vld [vmem:[#allocation7 + $0x28] sm:$0xff]
    %v1213 = vld [vmem:[#allocation7 + $0x30] sm:$0xff]
    %v1214 = vld [vmem:[#allocation7 + $0x38] sm:$0xff]
    %v1215 = vld [vmem:[#allocation7 + $0x40] sm:$0xff]
    %v1216 = vld [vmem:[#allocation7 + $0x48] sm:$0xff]
    %v1217 = vld [vmem:[#allocation7 + $0x50] sm:$0xff]
    %v1218 = vld [vmem:[#allocation7 + $0x58] sm:$0xff]
    %v1219 = vld [vmem:[#allocation7 + $0x60] sm:$0xff]
    %v1220 = vld [vmem:[#allocation7 + $0x68] sm:$0xff]
    %v1221 = vld [vmem:[#allocation7 + $0x70] sm:$0xff]
    %v1222 = vld [vmem:[#allocation7 + $0x78] sm:$0xff]
    %v1223 = vld [vmem:[%s12 + $0x8] sm:$0xf]
    %v1225 = vlaneseq
    %v1226 = vshrl.u32 %v1225, 7
    %v1227 = vsub.s32 0, %v1226
    %v1228 = vrot.slane %v1223, %v1227
    %v1229 = vlaneseq
    %v1230 = vshrl.u32 %v1229, 7
    %v1231 = vsub.s32 1, %v1230
    %v1232 = vrot.slane %v1223, %v1231
    %v1233 = vlaneseq
    %v1234 = vshrl.u32 %v1233, 7
    %v1235 = vsub.s32 2, %v1234
    %v1236 = vrot.slane %v1223, %v1235
    %v1237 = vlaneseq
    %v1238 = vshrl.u32 %v1237, 7
    %v1239 = vsub.s32 3, %v1238
    %v1240 = vrot.slane %v1223, %v1239
    %v1261 = vunpack.c.l.b16 %v1207
    %v1262 = vunpack.c.h.b16 %v1207
    %v1263 = vunpack.c.l.b16 %v1208
    %v1264 = vunpack.c.h.b16 %v1208
    %v1265 = vunpack.c.l.b16 %v1209
    %v1266 = vunpack.c.h.b16 %v1209
    %v1267 = vunpack.c.l.b16 %v1210
    %v1268 = vunpack.c.h.b16 %v1210
    %v1269 = vunpack.c.l.b16 %v1211
    %v1270 = vunpack.c.h.b16 %v1211
    %v1271 = vunpack.c.l.b16 %v1212
    %v1272 = vunpack.c.h.b16 %v1212
    %v1273 = vunpack.c.l.b16 %v1213
    %v1274 = vunpack.c.h.b16 %v1213
    %v1275 = vunpack.c.l.b16 %v1214
    %v1276 = vunpack.c.h.b16 %v1214
    %v1277 = vunpack.c.l.b16 %v1215
    %v1278 = vunpack.c.h.b16 %v1215
    %v1279 = vunpack.c.l.b16 %v1216
    %v1280 = vunpack.c.h.b16 %v1216
    %v1281 = vunpack.c.l.b16 %v1217
    %v1282 = vunpack.c.h.b16 %v1217
    %v1283 = vunpack.c.l.b16 %v1218
    %v1284 = vunpack.c.h.b16 %v1218
    %v1285 = vunpack.c.l.b16 %v1219
    %v1286 = vunpack.c.h.b16 %v1219
    %v1287 = vunpack.c.l.b16 %v1220
    %v1288 = vunpack.c.h.b16 %v1220
    %v1289 = vunpack.c.l.b16 %v1221
    %v1290 = vunpack.c.h.b16 %v1221
    %v1291 = vunpack.c.l.b16 %v1222
    %v1292 = vunpack.c.h.b16 %v1222
    %v1293 = vpack.c.b16 %v1265, %v1261
    %v1294 = vpack.c.b16 %v1266, %v1262
    %v1295 = vpack.c.b16 %v1267, %v1263
    %v1296 = vpack.c.b16 %v1268, %v1264
    %v1297 = vpack.c.b16 %v1273, %v1269
    %v1298 = vpack.c.b16 %v1274, %v1270
    %v1299 = vpack.c.b16 %v1275, %v1271
    %v1300 = vpack.c.b16 %v1276, %v1272
    %v1301 = vpack.c.b16 %v1281, %v1277
    %v1302 = vpack.c.b16 %v1282, %v1278
    %v1303 = vpack.c.b16 %v1283, %v1279
    %v1304 = vpack.c.b16 %v1284, %v1280
    %v1305 = vpack.c.b16 %v1289, %v1285
    %v1306 = vpack.c.b16 %v1290, %v1286
    %v1307 = vpack.c.b16 %v1291, %v1287
    %v1308 = vpack.c.b16 %v1292, %v1288
    %vm1325 = vcmask 523264
    %v1327 = vsel %vm1325, %v1206, 0
    %1329 = vmatprep.subr.bf16.mxu0 %v1294
    %1330 = vmatpush1.bf16.msra.mxu0 %v1293
    %1331 = vmatprep.subr.bf16.mxu0 %v1298
    %1332 = vmatpush1.bf16.msra.mxu0 %v1297
    %1333 = vmatprep.subr.bf16.mxu0 %v1302
    %1334 = vmatpush1.bf16.msra.mxu0 %v1301
    %1335 = vmatprep.subr.bf16.mxu0 %v1306
    %1336 = vmatpush1.bf16.msra.mxu0 %v1305
    %1337 = vmatprep.subr.bf16.mxu0 0
    %1338 = vmatpush1.bf16.msra.mxu0 0
    %1339 = vmatprep.subr.bf16.mxu0 0
    %1340 = vmatpush1.bf16.msra.mxu0 0
    %1341 = vmatprep.subr.bf16.mxu0 0
    %1342 = vmatpush1.bf16.msra.mxu0 0
    %1343 = vmatprep.subr.bf16.mxu0 0
    %1344 = vmatpush1.bf16.msra.mxu0 0
    %1345 = vmatprep.subr.bf16.mxu0 0
    %1346 = vmatpush1.bf16.msra.mxu0 0
    %1347 = vmatprep.subr.bf16.mxu0 0
    %1348 = vmatpush1.bf16.msra.mxu0 0
    %1349 = vmatprep.subr.bf16.mxu0 0
    %1350 = vmatpush1.bf16.msra.mxu0 0
    %1351 = vmatprep.subr.bf16.mxu0 0
    %1352 = vmatpush1.bf16.msra.mxu0 0
    %1353 = vmatprep.subr.bf16.mxu0 0
    %1354 = vmatpush1.bf16.msra.mxu0 0
    %1355 = vmatprep.subr.bf16.mxu0 0
    %1356 = vmatpush1.bf16.msra.mxu0 0
    %1357 = vmatprep.subr.bf16.mxu0 0
    %1358 = vmatpush1.bf16.msra.mxu0 0
    %1359 = vmatprep.subr.bf16.mxu0 0
    %1360 = vmatpush1.bf16.msra.mxu0 0
    %1361 = vmatprep.mubr.bf16.mxu0 0
    %1362 = vmatmul.mubr.bf16.gmra.mrb[0].mxu0 %v1327
    %v1363 = vpop.f32.mrb[0].mxu0
    %v1364 = vadd.f32 %v1228, %v1363
    %v1365 = vpop.f32.mrb[0].mxu0
    %v1366 = vadd.f32 %v1232, %v1365
    %v1367 = vpop.f32.mrb[0].mxu0
    %v1368 = vpop.f32.mrb[0].mxu0
    %1369 = vdwg.mxu0
    %1370 = vmatprep.subr.bf16.mxu0 %v1296
    %1371 = vmatpush1.bf16.msra.mxu0 %v1295
    %1372 = vmatprep.subr.bf16.mxu0 %v1300
    %1373 = vmatpush1.bf16.msra.mxu0 %v1299
    %1374 = vmatprep.subr.bf16.mxu0 %v1304
    %1375 = vmatpush1.bf16.msra.mxu0 %v1303
    %1376 = vmatprep.subr.bf16.mxu0 %v1308
    %1377 = vmatpush1.bf16.msra.mxu0 %v1307
    %1378 = vmatprep.subr.bf16.mxu0 0
    %1379 = vmatpush1.bf16.msra.mxu0 0
    %1380 = vmatprep.subr.bf16.mxu0 0
    %1381 = vmatpush1.bf16.msra.mxu0 0
    %1382 = vmatprep.subr.bf16.mxu0 0
    %1383 = vmatpush1.bf16.msra.mxu0 0
    %1384 = vmatprep.subr.bf16.mxu0 0
    %1385 = vmatpush1.bf16.msra.mxu0 0
    %1386 = vmatprep.subr.bf16.mxu0 0
    %1387 = vmatpush1.bf16.msra.mxu0 0
    %1388 = vmatprep.subr.bf16.mxu0 0
    %1389 = vmatpush1.bf16.msra.mxu0 0
    %1390 = vmatprep.subr.bf16.mxu0 0
    %1391 = vmatpush1.bf16.msra.mxu0 0
    %1392 = vmatprep.subr.bf16.mxu0 0
    %1393 = vmatpush1.bf16.msra.mxu0 0
    %1394 = vmatprep.subr.bf16.mxu0 0
    %1395 = vmatpush1.bf16.msra.mxu0 0
    %1396 = vmatprep.subr.bf16.mxu0 0
    %1397 = vmatpush1.bf16.msra.mxu0 0
    %1398 = vmatprep.subr.bf16.mxu0 0
    %1399 = vmatpush1.bf16.msra.mxu0 0
    %1400 = vmatprep.subr.bf16.mxu0 0
    %1401 = vmatpush1.bf16.msra.mxu0 0
    %1402 = vmatprep.mubr.bf16.mxu0 0
    %1403 = vmatmul.mubr.bf16.gmra.mrb[0].mxu0 %v1327
    %v1404 = vpop.f32.mrb[0].mxu0
    %v1405 = vadd.f32 %v1236, %v1404
    %v1406 = vpop.f32.mrb[0].mxu0
    %v1407 = vadd.f32 %v1240, %v1406
    %v1408 = vpop.f32.mrb[0].mxu0
    %v1409 = vpop.f32.mrb[0].mxu0
    %1410 = vdwg.mxu0
    %v1411 = vmul.f32 %v1405, 0.5
    %v1412 = vmul.f32 %v1407, 0.5
    %v1413 = vmul.f32 %v1411, 1.442695
    %v1414 = vpow.pop %v1413
    %v1415 = vmul.f32 %v1412, 1.442695
    %v1416 = vpow.pop %v1415
    %v1417 = vld [vmem:[%s1] sm:$0xff]
    %v1418 = vunpack.c.l.bf16 %v1417
    %v1419 = vunpack.c.h.bf16 %v1417
    %v1420 = vmul.f32 %v1418, %v1414
    %v1421 = vmul.f32 %v1419, %v1416
    %v1422 = vadd.f32 %v1364, %v1420
    %v1423 = vadd.f32 %v1366, %v1421
    %v1424 = vpack.c.bf16 %v1422, %v1422
    %v1425 = vpack.c.bf16 %v1423, %v1423
    %v1426 = vld [vmem:[%s7] sm:$0xf]
    %v1427 = vld [vmem:[%s7 + $0x4] sm:$0xf]
    %v1428 = vld [vmem:[%s7 + $0x8] sm:$0xf]
    %v1429 = vld [vmem:[%s7 + $0xc] sm:$0xf]
    %v1430 = vld [vmem:[%s7 + $0x10] sm:$0xf]
    %v1431 = vld [vmem:[%s7 + $0x14] sm:$0xf]
    %v1432 = vld [vmem:[%s7 + $0x18] sm:$0xf]
    %v1433 = vld [vmem:[%s7 + $0x1c] sm:$0xf]
    %v1434 = vld [vmem:[%s7 + $0x20] sm:$0xf]
    %v1435 = vld [vmem:[%s7 + $0x24] sm:$0xf]
    %v1436 = vld [vmem:[%s7 + $0x28] sm:$0xf]
    %v1437 = vld [vmem:[%s7 + $0x2c] sm:$0xf]
    %v1438 = vld [vmem:[%s7 + $0x30] sm:$0xf]
    %v1439 = vld [vmem:[%s7 + $0x34] sm:$0xf]
    %v1440 = vld [vmem:[%s7 + $0x38] sm:$0xf]
    %v1441 = vld [vmem:[%s7 + $0x3c] sm:$0xf]
    %v1442 = vld [vmem:[%s7 + $0x40] sm:$0xf]
    %v1443 = vld [vmem:[%s7 + $0x44] sm:$0xf]
    %v1444 = vld [vmem:[%s7 + $0x48] sm:$0xf]
    %v1445 = vld [vmem:[%s7 + $0x4c] sm:$0xf]
    %v1446 = vld [vmem:[%s7 + $0x50] sm:$0xf]
    %v1447 = vld [vmem:[%s7 + $0x54] sm:$0xf]
    %v1448 = vld [vmem:[%s7 + $0x58] sm:$0xf]
    %v1449 = vld [vmem:[%s7 + $0x5c] sm:$0xf]
    %v1450 = vld [vmem:[%s7 + $0x60] sm:$0xf]
    %v1451 = vld [vmem:[%s7 + $0x64] sm:$0xf]
    %v1452 = vld [vmem:[%s7 + $0x68] sm:$0xf]
    %v1453 = vld [vmem:[%s7 + $0x6c] sm:$0xf]
    %v1454 = vld [vmem:[%s7 + $0x70] sm:$0xf]
    %v1455 = vld [vmem:[%s7 + $0x74] sm:$0xf]
    %v1456 = vld [vmem:[%s7 + $0x78] sm:$0xf]
    %v1457 = vld [vmem:[%s7 + $0x7c] sm:$0xf]
    %v1458 = vld [vmem:[%s12 + $0xc] sm:$0x1]
    %v1460 = vlaneseq
    %v1461 = vshrl.u32 %v1460, 7
    %v1462 = vsub.s32 0, %v1461
    %v1463 = vrot.slane %v1458, %v1462
    %v1497 = vunpack.c.l.b16 %v1426
    %v1498 = vunpack.c.l.b16 %v1427
    %v1499 = vunpack.c.l.b16 %v1428
    %v1500 = vunpack.c.l.b16 %v1429
    %v1501 = vunpack.c.l.b16 %v1430
    %v1502 = vunpack.c.l.b16 %v1431
    %v1503 = vunpack.c.l.b16 %v1432
    %v1504 = vunpack.c.l.b16 %v1433
    %v1505 = vunpack.c.l.b16 %v1434
    %v1506 = vunpack.c.l.b16 %v1435
    %v1507 = vunpack.c.l.b16 %v1436
    %v1508 = vunpack.c.l.b16 %v1437
    %v1509 = vunpack.c.l.b16 %v1438
    %v1510 = vunpack.c.l.b16 %v1439
    %v1511 = vunpack.c.l.b16 %v1440
    %v1512 = vunpack.c.l.b16 %v1441
    %v1513 = vunpack.c.l.b16 %v1442
    %v1514 = vunpack.c.l.b16 %v1443
    %v1515 = vunpack.c.l.b16 %v1444
    %v1516 = vunpack.c.l.b16 %v1445
    %v1517 = vunpack.c.l.b16 %v1446
    %v1518 = vunpack.c.l.b16 %v1447
    %v1519 = vunpack.c.l.b16 %v1448
    %v1520 = vunpack.c.l.b16 %v1449
    %v1521 = vunpack.c.l.b16 %v1450
    %v1522 = vunpack.c.l.b16 %v1451
    %v1523 = vunpack.c.l.b16 %v1452
    %v1524 = vunpack.c.l.b16 %v1453
    %v1525 = vunpack.c.l.b16 %v1454
    %v1526 = vunpack.c.l.b16 %v1455
    %v1527 = vunpack.c.l.b16 %v1456
    %v1528 = vunpack.c.l.b16 %v1457
    %v1529 = vpack.c.b16 %v1498, %v1497
    %v1530 = vpack.c.b16 %v1500, %v1499
    %v1531 = vpack.c.b16 %v1502, %v1501
    %v1532 = vpack.c.b16 %v1504, %v1503
    %v1533 = vpack.c.b16 %v1506, %v1505
    %v1534 = vpack.c.b16 %v1508, %v1507
    %v1535 = vpack.c.b16 %v1510, %v1509
    %v1536 = vpack.c.b16 %v1512, %v1511
    %v1537 = vpack.c.b16 %v1514, %v1513
    %v1538 = vpack.c.b16 %v1516, %v1515
    %v1539 = vpack.c.b16 %v1518, %v1517
    %v1540 = vpack.c.b16 %v1520, %v1519
    %v1541 = vpack.c.b16 %v1522, %v1521
    %v1542 = vpack.c.b16 %v1524, %v1523
    %v1543 = vpack.c.b16 %v1526, %v1525
    %v1544 = vpack.c.b16 %v1528, %v1527
    %1561 = vmatprep.subr.bf16.mxu0 0
    %1562 = vmatpush1.bf16.msra.mxu0 %v1529
    %1563 = vmatprep.subr.bf16.mxu0 0
    %1564 = vmatpush1.bf16.msra.mxu0 %v1530
    %1565 = vmatprep.subr.bf16.mxu0 0
    %1566 = vmatpush1.bf16.msra.mxu0 %v1531
    %1567 = vmatprep.subr.bf16.mxu0 0
    %1568 = vmatpush1.bf16.msra.mxu0 %v1532
    %1569 = vmatprep.subr.bf16.mxu0 0
    %1570 = vmatpush1.bf16.msra.mxu0 %v1533
    %1571 = vmatprep.subr.bf16.mxu0 0
    %1572 = vmatpush1.bf16.msra.mxu0 %v1534
    %1573 = vmatprep.subr.bf16.mxu0 0
    %1574 = vmatpush1.bf16.msra.mxu0 %v1535
    %1575 = vmatprep.subr.bf16.mxu0 0
    %1576 = vmatpush1.bf16.msra.mxu0 %v1536
    %1577 = vmatprep.subr.bf16.mxu0 0
    %1578 = vmatpush1.bf16.msra.mxu0 %v1537
    %1579 = vmatprep.subr.bf16.mxu0 0
    %1580 = vmatpush1.bf16.msra.mxu0 %v1538
    %1581 = vmatprep.subr.bf16.mxu0 0
    %1582 = vmatpush1.bf16.msra.mxu0 %v1539
    %1583 = vmatprep.subr.bf16.mxu0 0
    %1584 = vmatpush1.bf16.msra.mxu0 %v1540
    %1585 = vmatprep.subr.bf16.mxu0 0
    %1586 = vmatpush1.bf16.msra.mxu0 %v1541
    %1587 = vmatprep.subr.bf16.mxu0 0
    %1588 = vmatpush1.bf16.msra.mxu0 %v1542
    %1589 = vmatprep.subr.bf16.mxu0 0
    %1590 = vmatpush1.bf16.msra.mxu0 %v1543
    %1591 = vmatprep.subr.bf16.mxu0 0
    %1592 = vmatpush1.bf16.msra.mxu0 %v1544
    %1593 = vmatprep.mubr.bf16.mxu0 %v1425
    %1594 = vmatmul.mubr.bf16.gmra.mrb[0].mxu0 %v1424
    %v1595 = vpop.f32.mrb[0].mxu0
    %v1596 = vadd.f32 %v1463, %v1595
    %v1597 = vpop.f32.mrb[0].mxu0
    %v1598 = vpop.f32.mrb[0].mxu0
    %v1599 = vpop.f32.mrb[0].mxu0
    %1600 = vdwg.mxu0
    %v1601 = vmax.f32 %v1596, 0.0
    %v1602 = vpack.c.bf16 %v1601, %v1601
    %v1603 = vld [vmem:[%s8] sm:$0xf]
    %v1604 = vld [vmem:[%s8 + $0x4] sm:$0xf]
    %v1605 = vld [vmem:[%s8 + $0x8] sm:$0xf]
    %v1606 = vld [vmem:[%s8 + $0xc] sm:$0xf]
    %v1607 = vld [vmem:[%s8 + $0x10] sm:$0xf]
    %v1608 = vld [vmem:[%s8 + $0x14] sm:$0xf]
    %v1609 = vld [vmem:[%s8 + $0x18] sm:$0xf]
    %v1610 = vld [vmem:[%s8 + $0x1c] sm:$0xf]
    %v1611 = vld [vmem:[%s12 + $0xd] sm:$0x1]
    %v1613 = vlaneseq
    %v1614 = vshrl.u32 %v1613, 7
    %v1615 = vsub.s32 0, %v1614
    %v1616 = vrot.slane %v1611, %v1615
    %v1626 = vunpack.c.l.b16 %v1603
    %v1627 = vunpack.c.l.b16 %v1604
    %v1628 = vunpack.c.l.b16 %v1605
    %v1629 = vunpack.c.l.b16 %v1606
    %v1630 = vunpack.c.l.b16 %v1607
    %v1631 = vunpack.c.l.b16 %v1608
    %v1632 = vunpack.c.l.b16 %v1609
    %v1633 = vunpack.c.l.b16 %v1610
    %v1634 = vpack.c.b16 %v1627, %v1626
    %v1635 = vpack.c.b16 %v1629, %v1628
    %v1636 = vpack.c.b16 %v1631, %v1630
    %v1637 = vpack.c.b16 %v1633, %v1632
    %v1643 = vsel %vm1325, %v1602, 0
    %1645 = vmatprep.subr.bf16.mxu0 0
    %1646 = vmatpush1.bf16.msra.mxu0 %v1634
    %1647 = vmatprep.subr.bf16.mxu0 0
    %1648 = vmatpush1.bf16.msra.mxu0 %v1635
    %1649 = vmatprep.subr.bf16.mxu0 0
    %1650 = vmatpush1.bf16.msra.mxu0 %v1636
    %1651 = vmatprep.subr.bf16.mxu0 0
    %1652 = vmatpush1.bf16.msra.mxu0 %v1637
    %1653 = vmatprep.subr.bf16.mxu0 0
    %1654 = vmatpush1.bf16.msra.mxu0 0
    %1655 = vmatprep.subr.bf16.mxu0 0
    %1656 = vmatpush1.bf16.msra.mxu0 0
    %1657 = vmatprep.subr.bf16.mxu0 0
    %1658 = vmatpush1.bf16.msra.mxu0 0
    %1659 = vmatprep.subr.bf16.mxu0 0
    %1660 = vmatpush1.bf16.msra.mxu0 0
    %1661 = vmatprep.subr.bf16.mxu0 0
    %1662 = vmatpush1.bf16.msra.mxu0 0
    %1663 = vmatprep.subr.bf16.mxu0 0
    %1664 = vmatpush1.bf16.msra.mxu0 0
    %1665 = vmatprep.subr.bf16.mxu0 0
    %1666 = vmatpush1.bf16.msra.mxu0 0
    %1667 = vmatprep.subr.bf16.mxu0 0
    %1668 = vmatpush1.bf16.msra.mxu0 0
    %1669 = vmatprep.subr.bf16.mxu0 0
    %1670 = vmatpush1.bf16.msra.mxu0 0
    %1671 = vmatprep.subr.bf16.mxu0 0
    %1672 = vmatpush1.bf16.msra.mxu0 0
    %1673 = vmatprep.subr.bf16.mxu0 0
    %1674 = vmatpush1.bf16.msra.mxu0 0
    %1675 = vmatprep.subr.bf16.mxu0 0
    %1676 = vmatpush1.bf16.msra.mxu0 0
    %1677 = vmatprep.mubr.bf16.mxu0 0
    %1678 = vmatmul.mubr.bf16.gmra.mrb[0].mxu0 %v1643
    %v1679 = vpop.f32.mrb[0].mxu0
    %v1680 = vadd.f32 %v1616, %v1679
    %v1681 = vpop.f32.mrb[0].mxu0
    %v1682 = vpop.f32.mrb[0].mxu0
    %v1683 = vpop.f32.mrb[0].mxu0
    %1684 = vdwg.mxu0
    %v1685 = vmax.f32 %v1680, 0.0
    %v1686 = vpack.c.bf16 %v1685, %v1685
    %v1687 = vld [vmem:[#allocation8] sm:$0xff]
    %v1688 = vld [vmem:[#allocation8 + $0x8] sm:$0xff]
    %v1689 = vld [vmem:[#allocation8 + $0x10] sm:$0xff]
    %v1690 = vld [vmem:[#allocation8 + $0x18] sm:$0xff]
    %v1691 = vld [vmem:[#allocation8 + $0x20] sm:$0xff]
    %v1692 = vld [vmem:[#allocation8 + $0x28] sm:$0xff]
    %v1693 = vld [vmem:[#allocation8 + $0x30] sm:$0xff]
    %v1694 = vld [vmem:[#allocation8 + $0x38] sm:$0xff]
    %v1695 = vld [vmem:[#allocation8 + $0x40] sm:$0xff]
    %v1696 = vld [vmem:[#allocation8 + $0x48] sm:$0xff]
    %v1697 = vld [vmem:[#allocation8 + $0x50] sm:$0xff]
    %v1698 = vld [vmem:[#allocation8 + $0x58] sm:$0xff]
    %v1699 = vld [vmem:[#allocation8 + $0x60] sm:$0xff]
    %v1700 = vld [vmem:[#allocation8 + $0x68] sm:$0xff]
    %v1701 = vld [vmem:[#allocation8 + $0x70] sm:$0xff]
    %v1702 = vld [vmem:[#allocation8 + $0x78] sm:$0xff]
    %v1703 = vld [vmem:[%s12 + $0xe] sm:$0x3]
    %v1705 = vlaneseq
    %v1706 = vshrl.u32 %v1705, 7
    %v1707 = vsub.s32 0, %v1706
    %v1708 = vrot.slane %v1703, %v1707
    %v1709 = vlaneseq
    %v1710 = vshrl.u32 %v1709, 7
    %v1711 = vsub.s32 1, %v1710
    %v1712 = vrot.slane %v1703, %v1711
    %v1731 = vunpack.c.l.b16 %v1687
    %v1732 = vunpack.c.h.b16 %v1687
    %v1733 = vunpack.c.l.b16 %v1688
    %v1734 = vunpack.c.h.b16 %v1688
    %v1735 = vunpack.c.l.b16 %v1689
    %v1736 = vunpack.c.h.b16 %v1689
    %v1737 = vunpack.c.l.b16 %v1690
    %v1738 = vunpack.c.h.b16 %v1690
    %v1739 = vunpack.c.l.b16 %v1691
    %v1740 = vunpack.c.h.b16 %v1691
    %v1741 = vunpack.c.l.b16 %v1692
    %v1742 = vunpack.c.h.b16 %v1692
    %v1743 = vunpack.c.l.b16 %v1693
    %v1744 = vunpack.c.h.b16 %v1693
    %v1745 = vunpack.c.l.b16 %v1694
    %v1746 = vunpack.c.h.b16 %v1694
    %v1747 = vunpack.c.l.b16 %v1695
    %v1748 = vunpack.c.h.b16 %v1695
    %v1749 = vunpack.c.l.b16 %v1696
    %v1750 = vunpack.c.h.b16 %v1696
    %v1751 = vunpack.c.l.b16 %v1697
    %v1752 = vunpack.c.h.b16 %v1697
    %v1753 = vunpack.c.l.b16 %v1698
    %v1754 = vunpack.c.h.b16 %v1698
    %v1755 = vunpack.c.l.b16 %v1699
    %v1756 = vunpack.c.h.b16 %v1699
    %v1757 = vunpack.c.l.b16 %v1700
    %v1758 = vunpack.c.h.b16 %v1700
    %v1759 = vunpack.c.l.b16 %v1701
    %v1760 = vunpack.c.h.b16 %v1701
    %v1761 = vunpack.c.l.b16 %v1702
    %v1762 = vunpack.c.h.b16 %v1702
    %v1763 = vpack.c.b16 %v1733, %v1731
    %v1764 = vpack.c.b16 %v1734, %v1732
    %v1765 = vpack.c.b16 %v1737, %v1735
    %v1766 = vpack.c.b16 %v1738, %v1736
    %v1767 = vpack.c.b16 %v1741, %v1739
    %v1768 = vpack.c.b16 %v1742, %v1740
    %v1769 = vpack.c.b16 %v1745, %v1743
    %v1770 = vpack.c.b16 %v1746, %v1744
    %v1771 = vpack.c.b16 %v1749, %v1747
    %v1772 = vpack.c.b16 %v1750, %v1748
    %v1773 = vpack.c.b16 %v1753, %v1751
    %v1774 = vpack.c.b16 %v1754, %v1752
    %v1775 = vpack.c.b16 %v1757, %v1755
    %v1776 = vpack.c.b16 %v1758, %v1756
    %v1777 = vpack.c.b16 %v1761, %v1759
    %v1778 = vpack.c.b16 %v1762, %v1760
    %1795 = vmatprep.subr.bf16.mxu0 %v1764
    %1796 = vmatpush1.bf16.msra.mxu0 %v1763
    %1797 = vmatprep.subr.bf16.mxu0 %v1766
    %1798 = vmatpush1.bf16.msra.mxu0 %v1765
    %1799 = vmatprep.subr.bf16.mxu0 %v1768
    %1800 = vmatpush1.bf16.msra.mxu0 %v1767
    %1801 = vmatprep.subr.bf16.mxu0 %v1770
    %1802 = vmatpush1.bf16.msra.mxu0 %v1769
    %1803 = vmatprep.subr.bf16.mxu0 %v1772
    %1804 = vmatpush1.bf16.msra.mxu0 %v1771
    %1805 = vmatprep.subr.bf16.mxu0 %v1774
    %1806 = vmatpush1.bf16.msra.mxu0 %v1773
    %1807 = vmatprep.subr.bf16.mxu0 %v1776
    %1808 = vmatpush1.bf16.msra.mxu0 %v1775
    %1809 = vmatprep.subr.bf16.mxu0 %v1778
    %1810 = vmatpush1.bf16.msra.mxu0 %v1777
    %1811 = vmatprep.subr.bf16.mxu0 0
    %1812 = vmatpush1.bf16.msra.mxu0 0
    %1813 = vmatprep.subr.bf16.mxu0 0
    %1814 = vmatpush1.bf16.msra.mxu0 0
    %1815 = vmatprep.subr.bf16.mxu0 0
    %1816 = vmatpush1.bf16.msra.mxu0 0
    %1817 = vmatprep.subr.bf16.mxu0 0
    %1818 = vmatpush1.bf16.msra.mxu0 0
    %1819 = vmatprep.subr.bf16.mxu0 0
    %1820 = vmatpush1.bf16.msra.mxu0 0
    %1821 = vmatprep.subr.bf16.mxu0 0
    %1822 = vmatpush1.bf16.msra.mxu0 0
    %1823 = vmatprep.subr.bf16.mxu0 0
    %1824 = vmatpush1.bf16.msra.mxu0 0
    %1825 = vmatprep.subr.bf16.mxu0 0
    %1826 = vmatpush1.bf16.msra.mxu0 0
    %1827 = vmatprep.mubr.bf16.mxu0 0
    %1828 = vmatmul.mubr.bf16.gmra.mrb[0].mxu0 %v1686
    %v1829 = vpop.f32.mrb[0].mxu0
    %v1830 = vadd.f32 %v1708, %v1829
    %v1831 = vpop.f32.mrb[0].mxu0
    %v1832 = vadd.f32 %v1712, %v1831
    %v1833 = vpop.f32.mrb[0].mxu0
    %v1834 = vpop.f32.mrb[0].mxu0
    %1835 = vdwg.mxu0
    %v1836 = vmax.f32 %v1830, 0.0
    %v1837 = vmax.f32 %v1832, 0.0
    %v1838 = vpack.c.bf16 %v1836, %v1836
    %v1839 = vpack.c.bf16 %v1837, %v1837
    %v1840 = vld [vmem:[#allocation10] sm:$0xff]
    %v1841 = vld [vmem:[#allocation10 + $0x8] sm:$0xff]
    %v1842 = vld [vmem:[#allocation10 + $0x10] sm:$0xff]
    %v1843 = vld [vmem:[#allocation10 + $0x18] sm:$0xff]
    %v1844 = vld [vmem:[#allocation10 + $0x20] sm:$0xff]
    %v1845 = vld [vmem:[#allocation10 + $0x28] sm:$0xff]
    %v1846 = vld [vmem:[#allocation10 + $0x30] sm:$0xff]
    %v1847 = vld [vmem:[#allocation10 + $0x38] sm:$0xff]
    %v1848 = vld [vmem:[#allocation10 + $0x40] sm:$0xff]
    %v1849 = vld [vmem:[#allocation10 + $0x48] sm:$0xff]
    %v1850 = vld [vmem:[#allocation10 + $0x50] sm:$0xff]
    %v1851 = vld [vmem:[#allocation10 + $0x58] sm:$0xff]
    %v1852 = vld [vmem:[#allocation10 + $0x60] sm:$0xff]
    %v1853 = vld [vmem:[#allocation10 + $0x68] sm:$0xff]
    %v1854 = vld [vmem:[#allocation10 + $0x70] sm:$0xff]
    %v1855 = vld [vmem:[#allocation10 + $0x78] sm:$0xff]
    %v1856 = vld [vmem:[#allocation10 + $0x80] sm:$0xff]
    %v1857 = vld [vmem:[#allocation10 + $0x88] sm:$0xff]
    %v1858 = vld [vmem:[#allocation10 + $0x90] sm:$0xff]
    %v1859 = vld [vmem:[#allocation10 + $0x98] sm:$0xff]
    %v1860 = vld [vmem:[#allocation10 + $0xa0] sm:$0xff]
    %v1861 = vld [vmem:[#allocation10 + $0xa8] sm:$0xff]
    %v1862 = vld [vmem:[#allocation10 + $0xb0] sm:$0xff]
    %v1863 = vld [vmem:[#allocation10 + $0xb8] sm:$0xff]
    %v1864 = vld [vmem:[#allocation10 + $0xc0] sm:$0xff]
    %v1865 = vld [vmem:[#allocation10 + $0xc8] sm:$0xff]
    %v1866 = vld [vmem:[#allocation10 + $0xd0] sm:$0xff]
    %v1867 = vld [vmem:[#allocation10 + $0xd8] sm:$0xff]
    %v1868 = vld [vmem:[#allocation10 + $0xe0] sm:$0xff]
    %v1869 = vld [vmem:[#allocation10 + $0xe8] sm:$0xff]
    %v1870 = vld [vmem:[#allocation10 + $0xf0] sm:$0xff]
    %v1871 = vld [vmem:[#allocation10 + $0xf8] sm:$0xff]
    %v1872 = vld [vmem:[#allocation10 + $0x100] sm:$0xff]
    %v1873 = vld [vmem:[#allocation10 + $0x108] sm:$0xff]
    %v1874 = vld [vmem:[#allocation10 + $0x110] sm:$0xff]
    %v1875 = vld [vmem:[#allocation10 + $0x118] sm:$0xff]
    %v1876 = vld [vmem:[#allocation10 + $0x120] sm:$0xff]
    %v1877 = vld [vmem:[#allocation10 + $0x128] sm:$0xff]
    %v1878 = vld [vmem:[#allocation10 + $0x130] sm:$0xff]
    %v1879 = vld [vmem:[#allocation10 + $0x138] sm:$0xff]
    %v1880 = vld [vmem:[#allocation10 + $0x140] sm:$0xff]
    %v1881 = vld [vmem:[#allocation10 + $0x148] sm:$0xff]
    %v1882 = vld [vmem:[#allocation10 + $0x150] sm:$0xff]
    %v1883 = vld [vmem:[#allocation10 + $0x158] sm:$0xff]
    %v1884 = vld [vmem:[#allocation10 + $0x160] sm:$0xff]
    %v1885 = vld [vmem:[#allocation10 + $0x168] sm:$0xff]
    %v1886 = vld [vmem:[#allocation10 + $0x170] sm:$0xff]
    %v1887 = vld [vmem:[#allocation10 + $0x178] sm:$0xff]
    %v1888 = vld [vmem:[#allocation10 + $0x180] sm:$0xff]
    %v1889 = vld [vmem:[#allocation10 + $0x188] sm:$0xff]
    %v1890 = vld [vmem:[#allocation10 + $0x190] sm:$0xff]
    %v1891 = vld [vmem:[#allocation10 + $0x198] sm:$0xff]
    %v1892 = vld [vmem:[#allocation10 + $0x1a0] sm:$0xff]
    %v1893 = vld [vmem:[#allocation10 + $0x1a8] sm:$0xff]
    %v1894 = vld [vmem:[#allocation10 + $0x1b0] sm:$0xff]
    %v1895 = vld [vmem:[#allocation10 + $0x1b8] sm:$0xff]
    %v1896 = vld [vmem:[#allocation10 + $0x1c0] sm:$0xff]
    %v1897 = vld [vmem:[#allocation10 + $0x1c8] sm:$0xff]
    %v1898 = vld [vmem:[#allocation10 + $0x1d0] sm:$0xff]
    %v1899 = vld [vmem:[#allocation10 + $0x1d8] sm:$0xff]
    %v1900 = vld [vmem:[#allocation10 + $0x1e0] sm:$0xff]
    %v1901 = vld [vmem:[#allocation10 + $0x1e8] sm:$0xff]
    %v1902 = vld [vmem:[#allocation10 + $0x1f0] sm:$0xff]
    %v1903 = vld [vmem:[#allocation10 + $0x1f8] sm:$0xff]
    %v1904 = vld [vmem:[%s12 + $0x10] sm:$0xf]
    %v1906 = vlaneseq
    %v1907 = vshrl.u32 %v1906, 7
    %v1908 = vsub.s32 0, %v1907
    %v1909 = vrot.slane %v1904, %v1908
    %v1910 = vlaneseq
    %v1911 = vshrl.u32 %v1910, 7
    %v1912 = vsub.s32 1, %v1911
    %v1913 = vrot.slane %v1904, %v1912
    %v1914 = vlaneseq
    %v1915 = vshrl.u32 %v1914, 7
    %v1916 = vsub.s32 2, %v1915
    %v1917 = vrot.slane %v1904, %v1916
    %v1918 = vlaneseq
    %v1919 = vshrl.u32 %v1918, 7
    %v1920 = vsub.s32 3, %v1919
    %v1921 = vrot.slane %v1904, %v1920
    %v1990 = vunpack.c.l.b16 %v1840
    %v1991 = vunpack.c.h.b16 %v1840
    %v1992 = vunpack.c.l.b16 %v1841
    %v1993 = vunpack.c.h.b16 %v1841
    %v1994 = vunpack.c.l.b16 %v1842
    %v1995 = vunpack.c.h.b16 %v1842
    %v1996 = vunpack.c.l.b16 %v1843
    %v1997 = vunpack.c.h.b16 %v1843
    %v1998 = vunpack.c.l.b16 %v1844
    %v1999 = vunpack.c.h.b16 %v1844
    %v2000 = vunpack.c.l.b16 %v1845
    %v2001 = vunpack.c.h.b16 %v1845
    %v2002 = vunpack.c.l.b16 %v1846
    %v2003 = vunpack.c.h.b16 %v1846
    %v2004 = vunpack.c.l.b16 %v1847
    %v2005 = vunpack.c.h.b16 %v1847
    %v2006 = vunpack.c.l.b16 %v1848
    %v2007 = vunpack.c.h.b16 %v1848
    %v2008 = vunpack.c.l.b16 %v1849
    %v2009 = vunpack.c.h.b16 %v1849
    %v2010 = vunpack.c.l.b16 %v1850
    %v2011 = vunpack.c.h.b16 %v1850
    %v2012 = vunpack.c.l.b16 %v1851
    %v2013 = vunpack.c.h.b16 %v1851
    %v2014 = vunpack.c.l.b16 %v1852
    %v2015 = vunpack.c.h.b16 %v1852
    %v2016 = vunpack.c.l.b16 %v1853
    %v2017 = vunpack.c.h.b16 %v1853
    %v2018 = vunpack.c.l.b16 %v1854
    %v2019 = vunpack.c.h.b16 %v1854
    %v2020 = vunpack.c.l.b16 %v1855
    %v2021 = vunpack.c.h.b16 %v1855
    %v2022 = vunpack.c.l.b16 %v1856
    %v2023 = vunpack.c.h.b16 %v1856
    %v2024 = vunpack.c.l.b16 %v1857
    %v2025 = vunpack.c.h.b16 %v1857
    %v2026 = vunpack.c.l.b16 %v1858
    %v2027 = vunpack.c.h.b16 %v1858
    %v2028 = vunpack.c.l.b16 %v1859
    %v2029 = vunpack.c.h.b16 %v1859
    %v2030 = vunpack.c.l.b16 %v1860
    %v2031 = vunpack.c.h.b16 %v1860
    %v2032 = vunpack.c.l.b16 %v1861
    %v2033 = vunpack.c.h.b16 %v1861
    %v2034 = vunpack.c.l.b16 %v1862
    %v2035 = vunpack.c.h.b16 %v1862
    %v2036 = vunpack.c.l.b16 %v1863
    %v2037 = vunpack.c.h.b16 %v1863
    %v2038 = vunpack.c.l.b16 %v1864
    %v2039 = vunpack.c.h.b16 %v1864
    %v2040 = vunpack.c.l.b16 %v1865
    %v2041 = vunpack.c.h.b16 %v1865
    %v2042 = vunpack.c.l.b16 %v1866
    %v2043 = vunpack.c.h.b16 %v1866
    %v2044 = vunpack.c.l.b16 %v1867
    %v2045 = vunpack.c.h.b16 %v1867
    %v2046 = vunpack.c.l.b16 %v1868
    %v2047 = vunpack.c.h.b16 %v1868
    %v2048 = vunpack.c.l.b16 %v1869
    %v2049 = vunpack.c.h.b16 %v1869
    %v2050 = vunpack.c.l.b16 %v1870
    %v2051 = vunpack.c.h.b16 %v1870
    %v2052 = vunpack.c.l.b16 %v1871
    %v2053 = vunpack.c.h.b16 %v1871
    %v2054 = vunpack.c.l.b16 %v1872
    %v2055 = vunpack.c.h.b16 %v1872
    %v2056 = vunpack.c.l.b16 %v1873
    %v2057 = vunpack.c.h.b16 %v1873
    %v2058 = vunpack.c.l.b16 %v1874
    %v2059 = vunpack.c.h.b16 %v1874
    %v2060 = vunpack.c.l.b16 %v1875
    %v2061 = vunpack.c.h.b16 %v1875
    %v2062 = vunpack.c.l.b16 %v1876
    %v2063 = vunpack.c.h.b16 %v1876
    %v2064 = vunpack.c.l.b16 %v1877
    %v2065 = vunpack.c.h.b16 %v1877
    %v2066 = vunpack.c.l.b16 %v1878
    %v2067 = vunpack.c.h.b16 %v1878
    %v2068 = vunpack.c.l.b16 %v1879
    %v2069 = vunpack.c.h.b16 %v1879
    %v2070 = vunpack.c.l.b16 %v1880
    %v2071 = vunpack.c.h.b16 %v1880
    %v2072 = vunpack.c.l.b16 %v1881
    %v2073 = vunpack.c.h.b16 %v1881
    %v2074 = vunpack.c.l.b16 %v1882
    %v2075 = vunpack.c.h.b16 %v1882
    %v2076 = vunpack.c.l.b16 %v1883
    %v2077 = vunpack.c.h.b16 %v1883
    %v2078 = vunpack.c.l.b16 %v1884
    %v2079 = vunpack.c.h.b16 %v1884
    %v2080 = vunpack.c.l.b16 %v1885
    %v2081 = vunpack.c.h.b16 %v1885
    %v2082 = vunpack.c.l.b16 %v1886
    %v2083 = vunpack.c.h.b16 %v1886
    %v2084 = vunpack.c.l.b16 %v1887
    %v2085 = vunpack.c.h.b16 %v1887
    %v2086 = vunpack.c.l.b16 %v1888
    %v2087 = vunpack.c.h.b16 %v1888
    %v2088 = vunpack.c.l.b16 %v1889
    %v2089 = vunpack.c.h.b16 %v1889
    %v2090 = vunpack.c.l.b16 %v1890
    %v2091 = vunpack.c.h.b16 %v1890
    %v2092 = vunpack.c.l.b16 %v1891
    %v2093 = vunpack.c.h.b16 %v1891
    %v2094 = vunpack.c.l.b16 %v1892
    %v2095 = vunpack.c.h.b16 %v1892
    %v2096 = vunpack.c.l.b16 %v1893
    %v2097 = vunpack.c.h.b16 %v1893
    %v2098 = vunpack.c.l.b16 %v1894
    %v2099 = vunpack.c.h.b16 %v1894
    %v2100 = vunpack.c.l.b16 %v1895
    %v2101 = vunpack.c.h.b16 %v1895
    %v2102 = vunpack.c.l.b16 %v1896
    %v2103 = vunpack.c.h.b16 %v1896
    %v2104 = vunpack.c.l.b16 %v1897
    %v2105 = vunpack.c.h.b16 %v1897
    %v2106 = vunpack.c.l.b16 %v1898
    %v2107 = vunpack.c.h.b16 %v1898
    %v2108 = vunpack.c.l.b16 %v1899
    %v2109 = vunpack.c.h.b16 %v1899
    %v2110 = vunpack.c.l.b16 %v1900
    %v2111 = vunpack.c.h.b16 %v1900
    %v2112 = vunpack.c.l.b16 %v1901
    %v2113 = vunpack.c.h.b16 %v1901
    %v2114 = vunpack.c.l.b16 %v1902
    %v2115 = vunpack.c.h.b16 %v1902
    %v2116 = vunpack.c.l.b16 %v1903
    %v2117 = vunpack.c.h.b16 %v1903
    %v2118 = vpack.c.b16 %v1994, %v1990
    %v2119 = vpack.c.b16 %v1995, %v1991
    %v2120 = vpack.c.b16 %v1996, %v1992
    %v2121 = vpack.c.b16 %v1997, %v1993
    %v2122 = vpack.c.b16 %v2002, %v1998
    %v2123 = vpack.c.b16 %v2003, %v1999
    %v2124 = vpack.c.b16 %v2004, %v2000
    %v2125 = vpack.c.b16 %v2005, %v2001
    %v2126 = vpack.c.b16 %v2010, %v2006
    %v2127 = vpack.c.b16 %v2011, %v2007
    %v2128 = vpack.c.b16 %v2012, %v2008
    %v2129 = vpack.c.b16 %v2013, %v2009
    %v2130 = vpack.c.b16 %v2018, %v2014
    %v2131 = vpack.c.b16 %v2019, %v2015
    %v2132 = vpack.c.b16 %v2020, %v2016
    %v2133 = vpack.c.b16 %v2021, %v2017
    %v2134 = vpack.c.b16 %v2026, %v2022
    %v2135 = vpack.c.b16 %v2027, %v2023
    %v2136 = vpack.c.b16 %v2028, %v2024
    %v2137 = vpack.c.b16 %v2029, %v2025
    %v2138 = vpack.c.b16 %v2034, %v2030
    %v2139 = vpack.c.b16 %v2035, %v2031
    %v2140 = vpack.c.b16 %v2036, %v2032
    %v2141 = vpack.c.b16 %v2037, %v2033
    %v2142 = vpack.c.b16 %v2042, %v2038
    %v2143 = vpack.c.b16 %v2043, %v2039
    %v2144 = vpack.c.b16 %v2044, %v2040
    %v2145 = vpack.c.b16 %v2045, %v2041
    %v2146 = vpack.c.b16 %v2050, %v2046
    %v2147 = vpack.c.b16 %v2051, %v2047
    %v2148 = vpack.c.b16 %v2052, %v2048
    %v2149 = vpack.c.b16 %v2053, %v2049
    %v2150 = vpack.c.b16 %v2058, %v2054
    %v2151 = vpack.c.b16 %v2059, %v2055
    %v2152 = vpack.c.b16 %v2060, %v2056
    %v2153 = vpack.c.b16 %v2061, %v2057
    %v2154 = vpack.c.b16 %v2066, %v2062
    %v2155 = vpack.c.b16 %v2067, %v2063
    %v2156 = vpack.c.b16 %v2068, %v2064
    %v2157 = vpack.c.b16 %v2069, %v2065
    %v2158 = vpack.c.b16 %v2074, %v2070
    %v2159 = vpack.c.b16 %v2075, %v2071
    %v2160 = vpack.c.b16 %v2076, %v2072
    %v2161 = vpack.c.b16 %v2077, %v2073
    %v2162 = vpack.c.b16 %v2082, %v2078
    %v2163 = vpack.c.b16 %v2083, %v2079
    %v2164 = vpack.c.b16 %v2084, %v2080
    %v2165 = vpack.c.b16 %v2085, %v2081
    %v2166 = vpack.c.b16 %v2090, %v2086
    %v2167 = vpack.c.b16 %v2091, %v2087
    %v2168 = vpack.c.b16 %v2092, %v2088
    %v2169 = vpack.c.b16 %v2093, %v2089
    %v2170 = vpack.c.b16 %v2098, %v2094
    %v2171 = vpack.c.b16 %v2099, %v2095
    %v2172 = vpack.c.b16 %v2100, %v2096
    %v2173 = vpack.c.b16 %v2101, %v2097
    %v2174 = vpack.c.b16 %v2106, %v2102
    %v2175 = vpack.c.b16 %v2107, %v2103
    %v2176 = vpack.c.b16 %v2108, %v2104
    %v2177 = vpack.c.b16 %v2109, %v2105
    %v2178 = vpack.c.b16 %v2114, %v2110
    %v2179 = vpack.c.b16 %v2115, %v2111
    %v2180 = vpack.c.b16 %v2116, %v2112
    %v2181 = vpack.c.b16 %v2117, %v2113
    %2246 = vmatprep.subr.bf16.mxu0 %v2119
    %2247 = vmatpush1.bf16.msra.mxu0 %v2118
    %2248 = vmatprep.subr.bf16.mxu0 %v2123
    %2249 = vmatpush1.bf16.msra.mxu0 %v2122
    %2250 = vmatprep.subr.bf16.mxu0 %v2127
    %2251 = vmatpush1.bf16.msra.mxu0 %v2126
    %2252 = vmatprep.subr.bf16.mxu0 %v2131
    %2253 = vmatpush1.bf16.msra.mxu0 %v2130
    %2254 = vmatprep.subr.bf16.mxu0 %v2135
    %2255 = vmatpush1.bf16.msra.mxu0 %v2134
    %2256 = vmatprep.subr.bf16.mxu0 %v2139
    %2257 = vmatpush1.bf16.msra.mxu0 %v2138
    %2258 = vmatprep.subr.bf16.mxu0 %v2143
    %2259 = vmatpush1.bf16.msra.mxu0 %v2142
    %2260 = vmatprep.subr.bf16.mxu0 %v2147
    %2261 = vmatpush1.bf16.msra.mxu0 %v2146
    %2262 = vmatprep.subr.bf16.mxu0 %v2151
    %2263 = vmatpush1.bf16.msra.mxu0 %v2150
    %2264 = vmatprep.subr.bf16.mxu0 %v2155
    %2265 = vmatpush1.bf16.msra.mxu0 %v2154
    %2266 = vmatprep.subr.bf16.mxu0 %v2159
    %2267 = vmatpush1.bf16.msra.mxu0 %v2158
    %2268 = vmatprep.subr.bf16.mxu0 %v2163
    %2269 = vmatpush1.bf16.msra.mxu0 %v2162
    %2270 = vmatprep.subr.bf16.mxu0 %v2167
    %2271 = vmatpush1.bf16.msra.mxu0 %v2166
    %2272 = vmatprep.subr.bf16.mxu0 %v2171
    %2273 = vmatpush1.bf16.msra.mxu0 %v2170
    %2274 = vmatprep.subr.bf16.mxu0 %v2175
    %2275 = vmatpush1.bf16.msra.mxu0 %v2174
    %2276 = vmatprep.subr.bf16.mxu0 %v2179
    %2277 = vmatpush1.bf16.msra.mxu0 %v2178
    %2278 = vmatprep.mubr.bf16.mxu0 %v1839
    %2279 = vmatmul.mubr.bf16.gmra.mrb[0].mxu0 %v1838
    %v2280 = vpop.f32.mrb[0].mxu0
    %v2281 = vadd.f32 %v1909, %v2280
    %v2282 = vpop.f32.mrb[0].mxu0
    %v2283 = vadd.f32 %v1913, %v2282
    %v2284 = vpop.f32.mrb[0].mxu0
    %v2285 = vpop.f32.mrb[0].mxu0
    %2286 = vdwg.mxu0
    %2287 = vmatprep.subr.bf16.mxu0 %v2121
    %2288 = vmatpush1.bf16.msra.mxu0 %v2120
    %2289 = vmatprep.subr.bf16.mxu0 %v2125
    %2290 = vmatpush1.bf16.msra.mxu0 %v2124
    %2291 = vmatprep.subr.bf16.mxu0 %v2129
    %2292 = vmatpush1.bf16.msra.mxu0 %v2128
    %2293 = vmatprep.subr.bf16.mxu0 %v2133
    %2294 = vmatpush1.bf16.msra.mxu0 %v2132
    %2295 = vmatprep.subr.bf16.mxu0 %v2137
    %2296 = vmatpush1.bf16.msra.mxu0 %v2136
    %2297 = vmatprep.subr.bf16.mxu0 %v2141
    %2298 = vmatpush1.bf16.msra.mxu0 %v2140
    %2299 = vmatprep.subr.bf16.mxu0 %v2145
    %2300 = vmatpush1.bf16.msra.mxu0 %v2144
    %2301 = vmatprep.subr.bf16.mxu0 %v2149
    %2302 = vmatpush1.bf16.msra.mxu0 %v2148
    %2303 = vmatprep.subr.bf16.mxu0 %v2153
    %2304 = vmatpush1.bf16.msra.mxu0 %v2152
    %2305 = vmatprep.subr.bf16.mxu0 %v2157
    %2306 = vmatpush1.bf16.msra.mxu0 %v2156
    %2307 = vmatprep.subr.bf16.mxu0 %v2161
    %2308 = vmatpush1.bf16.msra.mxu0 %v2160
    %2309 = vmatprep.subr.bf16.mxu0 %v2165
    %2310 = vmatpush1.bf16.msra.mxu0 %v2164
    %2311 = vmatprep.subr.bf16.mxu0 %v2169
    %2312 = vmatpush1.bf16.msra.mxu0 %v2168
    %2313 = vmatprep.subr.bf16.mxu0 %v2173
    %2314 = vmatpush1.bf16.msra.mxu0 %v2172
    %2315 = vmatprep.subr.bf16.mxu0 %v2177
    %2316 = vmatpush1.bf16.msra.mxu0 %v2176
    %2317 = vmatprep.subr.bf16.mxu0 %v2181
    %2318 = vmatpush1.bf16.msra.mxu0 %v2180
    %2319 = vmatprep.mubr.bf16.mxu0 %v1839
    %2320 = vmatmul.mubr.bf16.gmra.mrb[0].mxu0 %v1838
    %v2321 = vpop.f32.mrb[0].mxu0
    %v2322 = vadd.f32 %v1917, %v2321
    %v2323 = vpop.f32.mrb[0].mxu0
    %v2324 = vadd.f32 %v1921, %v2323
    %v2325 = vpop.f32.mrb[0].mxu0
    %v2326 = vpop.f32.mrb[0].mxu0
    %2327 = vdwg.mxu0
    %v2328 = vmax.f32 %v2281, 0.0
    %v2329 = vmax.f32 %v2283, 0.0
    %v2330 = vmax.f32 %v2322, 0.0
    %v2331 = vmax.f32 %v2324, 0.0
    %v2332 = vpack.c.bf16 %v2328, %v2328
    %v2333 = vpack.c.bf16 %v2329, %v2329
    %v2334 = vpack.c.bf16 %v2330, %v2330
    %v2335 = vpack.c.bf16 %v2331, %v2331
    %v2336 = vld [vmem:[#allocation11] sm:$0xf]
    %v2337 = vld [vmem:[#allocation11 + $0x4] sm:$0xf]
    %v2338 = vld [vmem:[#allocation11 + $0x8] sm:$0xf]
    %v2339 = vld [vmem:[#allocation11 + $0xc] sm:$0xf]
    %v2340 = vld [vmem:[#allocation11 + $0x10] sm:$0xf]
    %v2341 = vld [vmem:[#allocation11 + $0x14] sm:$0xf]
    %v2342 = vld [vmem:[#allocation11 + $0x18] sm:$0xf]
    %v2343 = vld [vmem:[#allocation11 + $0x1c] sm:$0xf]
    %v2344 = vld [vmem:[#allocation11 + $0x20] sm:$0xf]
    %v2345 = vld [vmem:[#allocation11 + $0x24] sm:$0xf]
    %v2346 = vld [vmem:[#allocation11 + $0x28] sm:$0xf]
    %v2347 = vld [vmem:[#allocation11 + $0x2c] sm:$0xf]
    %v2348 = vld [vmem:[#allocation11 + $0x30] sm:$0xf]
    %v2349 = vld [vmem:[#allocation11 + $0x34] sm:$0xf]
    %v2350 = vld [vmem:[#allocation11 + $0x38] sm:$0xf]
    %v2351 = vld [vmem:[#allocation11 + $0x3c] sm:$0xf]
    %v2352 = vld [vmem:[#allocation11 + $0x40] sm:$0xf]
    %v2353 = vld [vmem:[#allocation11 + $0x44] sm:$0xf]
    %v2354 = vld [vmem:[#allocation11 + $0x48] sm:$0xf]
    %v2355 = vld [vmem:[#allocation11 + $0x4c] sm:$0xf]
    %v2356 = vld [vmem:[#allocation11 + $0x50] sm:$0xf]
    %v2357 = vld [vmem:[#allocation11 + $0x54] sm:$0xf]
    %v2358 = vld [vmem:[#allocation11 + $0x58] sm:$0xf]
    %v2359 = vld [vmem:[#allocation11 + $0x5c] sm:$0xf]
    %v2360 = vld [vmem:[#allocation11 + $0x60] sm:$0xf]
    %v2361 = vld [vmem:[#allocation11 + $0x64] sm:$0xf]
    %v2362 = vld [vmem:[#allocation11 + $0x68] sm:$0xf]
    %v2363 = vld [vmem:[#allocation11 + $0x6c] sm:$0xf]
    %v2364 = vld [vmem:[#allocation11 + $0x70] sm:$0xf]
    %v2365 = vld [vmem:[#allocation11 + $0x74] sm:$0xf]
    %v2366 = vld [vmem:[#allocation11 + $0x78] sm:$0xf]
    %v2367 = vld [vmem:[#allocation11 + $0x7c] sm:$0xf]
    %v2368 = vld [vmem:[#allocation11 + $0x80] sm:$0xf]
    %v2369 = vld [vmem:[#allocation11 + $0x84] sm:$0xf]
    %v2370 = vld [vmem:[#allocation11 + $0x88] sm:$0xf]
    %v2371 = vld [vmem:[#allocation11 + $0x8c] sm:$0xf]
    %v2372 = vld [vmem:[#allocation11 + $0x90] sm:$0xf]
    %v2373 = vld [vmem:[#allocation11 + $0x94] sm:$0xf]
    %v2374 = vld [vmem:[#allocation11 + $0x98] sm:$0xf]
    %v2375 = vld [vmem:[#allocation11 + $0x9c] sm:$0xf]
    %v2376 = vld [vmem:[#allocation11 + $0xa0] sm:$0xf]
    %v2377 = vld [vmem:[#allocation11 + $0xa4] sm:$0xf]
    %v2378 = vld [vmem:[#allocation11 + $0xa8] sm:$0xf]
    %v2379 = vld [vmem:[#allocation11 + $0xac] sm:$0xf]
    %v2380 = vld [vmem:[#allocation11 + $0xb0] sm:$0xf]
    %v2381 = vld [vmem:[#allocation11 + $0xb4] sm:$0xf]
    %v2382 = vld [vmem:[#allocation11 + $0xb8] sm:$0xf]
    %v2383 = vld [vmem:[#allocation11 + $0xbc] sm:$0xf]
    %v2384 = vld [vmem:[#allocation11 + $0xc0] sm:$0xf]
    %v2385 = vld [vmem:[#allocation11 + $0xc4] sm:$0xf]
    %v2386 = vld [vmem:[#allocation11 + $0xc8] sm:$0xf]
    %v2387 = vld [vmem:[#allocation11 + $0xcc] sm:$0xf]
    %v2388 = vld [vmem:[#allocation11 + $0xd0] sm:$0xf]
    %v2389 = vld [vmem:[#allocation11 + $0xd4] sm:$0xf]
    %v2390 = vld [vmem:[#allocation11 + $0xd8] sm:$0xf]
    %v2391 = vld [vmem:[#allocation11 + $0xdc] sm:$0xf]
    %v2392 = vld [vmem:[#allocation11 + $0xe0] sm:$0xf]
    %v2393 = vld [vmem:[#allocation11 + $0xe4] sm:$0xf]
    %v2394 = vld [vmem:[#allocation11 + $0xe8] sm:$0xf]
    %v2395 = vld [vmem:[#allocation11 + $0xec] sm:$0xf]
    %v2396 = vld [vmem:[#allocation11 + $0xf0] sm:$0xf]
    %v2397 = vld [vmem:[#allocation11 + $0xf4] sm:$0xf]
    %v2398 = vld [vmem:[#allocation11 + $0xf8] sm:$0xf]
    %v2399 = vld [vmem:[#allocation11 + $0xfc] sm:$0xf]
    %v2400 = vld [vmem:[%s12 + $0x14] sm:$0x1]
    %v2402 = vlaneseq
    %v2403 = vshrl.u32 %v2402, 7
    %v2404 = vsub.s32 0, %v2403
    %v2405 = vrot.slane %v2400, %v2404
    %v2471 = vunpack.c.l.b16 %v2336
    %v2472 = vunpack.c.l.b16 %v2337
    %v2473 = vunpack.c.l.b16 %v2338
    %v2474 = vunpack.c.l.b16 %v2339
    %v2475 = vunpack.c.l.b16 %v2340
    %v2476 = vunpack.c.l.b16 %v2341
    %v2477 = vunpack.c.l.b16 %v2342
    %v2478 = vunpack.c.l.b16 %v2343
    %v2479 = vunpack.c.l.b16 %v2344
    %v2480 = vunpack.c.l.b16 %v2345
    %v2481 = vunpack.c.l.b16 %v2346
    %v2482 = vunpack.c.l.b16 %v2347
    %v2483 = vunpack.c.l.b16 %v2348
    %v2484 = vunpack.c.l.b16 %v2349
    %v2485 = vunpack.c.l.b16 %v2350
    %v2486 = vunpack.c.l.b16 %v2351
    %v2487 = vunpack.c.l.b16 %v2352
    %v2488 = vunpack.c.l.b16 %v2353
    %v2489 = vunpack.c.l.b16 %v2354
    %v2490 = vunpack.c.l.b16 %v2355
    %v2491 = vunpack.c.l.b16 %v2356
    %v2492 = vunpack.c.l.b16 %v2357
    %v2493 = vunpack.c.l.b16 %v2358
    %v2494 = vunpack.c.l.b16 %v2359
    %v2495 = vunpack.c.l.b16 %v2360
    %v2496 = vunpack.c.l.b16 %v2361
    %v2497 = vunpack.c.l.b16 %v2362
    %v2498 = vunpack.c.l.b16 %v2363
    %v2499 = vunpack.c.l.b16 %v2364
    %v2500 = vunpack.c.l.b16 %v2365
    %v2501 = vunpack.c.l.b16 %v2366
    %v2502 = vunpack.c.l.b16 %v2367
    %v2503 = vunpack.c.l.b16 %v2368
    %v2504 = vunpack.c.l.b16 %v2369
    %v2505 = vunpack.c.l.b16 %v2370
    %v2506 = vunpack.c.l.b16 %v2371
    %v2507 = vunpack.c.l.b16 %v2372
    %v2508 = vunpack.c.l.b16 %v2373
    %v2509 = vunpack.c.l.b16 %v2374
    %v2510 = vunpack.c.l.b16 %v2375
    %v2511 = vunpack.c.l.b16 %v2376
    %v2512 = vunpack.c.l.b16 %v2377
    %v2513 = vunpack.c.l.b16 %v2378
    %v2514 = vunpack.c.l.b16 %v2379
    %v2515 = vunpack.c.l.b16 %v2380
    %v2516 = vunpack.c.l.b16 %v2381
    %v2517 = vunpack.c.l.b16 %v2382
    %v2518 = vunpack.c.l.b16 %v2383
    %v2519 = vunpack.c.l.b16 %v2384
    %v2520 = vunpack.c.l.b16 %v2385
    %v2521 = vunpack.c.l.b16 %v2386
    %v2522 = vunpack.c.l.b16 %v2387
    %v2523 = vunpack.c.l.b16 %v2388
    %v2524 = vunpack.c.l.b16 %v2389
    %v2525 = vunpack.c.l.b16 %v2390
    %v2526 = vunpack.c.l.b16 %v2391
    %v2527 = vunpack.c.l.b16 %v2392
    %v2528 = vunpack.c.l.b16 %v2393
    %v2529 = vunpack.c.l.b16 %v2394
    %v2530 = vunpack.c.l.b16 %v2395
    %v2531 = vunpack.c.l.b16 %v2396
    %v2532 = vunpack.c.l.b16 %v2397
    %v2533 = vunpack.c.l.b16 %v2398
    %v2534 = vunpack.c.l.b16 %v2399
    %v2535 = vpack.c.b16 %v2472, %v2471
    %v2536 = vpack.c.b16 %v2474, %v2473
    %v2537 = vpack.c.b16 %v2476, %v2475
    %v2538 = vpack.c.b16 %v2478, %v2477
    %v2539 = vpack.c.b16 %v2480, %v2479
    %v2540 = vpack.c.b16 %v2482, %v2481
    %v2541 = vpack.c.b16 %v2484, %v2483
    %v2542 = vpack.c.b16 %v2486, %v2485
    %v2543 = vpack.c.b16 %v2488, %v2487
    %v2544 = vpack.c.b16 %v2490, %v2489
    %v2545 = vpack.c.b16 %v2492, %v2491
    %v2546 = vpack.c.b16 %v2494, %v2493
    %v2547 = vpack.c.b16 %v2496, %v2495
    %v2548 = vpack.c.b16 %v2498, %v2497
    %v2549 = vpack.c.b16 %v2500, %v2499
    %v2550 = vpack.c.b16 %v2502, %v2501
    %v2551 = vpack.c.b16 %v2504, %v2503
    %v2552 = vpack.c.b16 %v2506, %v2505
    %v2553 = vpack.c.b16 %v2508, %v2507
    %v2554 = vpack.c.b16 %v2510, %v2509
    %v2555 = vpack.c.b16 %v2512, %v2511
    %v2556 = vpack.c.b16 %v2514, %v2513
    %v2557 = vpack.c.b16 %v2516, %v2515
    %v2558 = vpack.c.b16 %v2518, %v2517
    %v2559 = vpack.c.b16 %v2520, %v2519
    %v2560 = vpack.c.b16 %v2522, %v2521
    %v2561 = vpack.c.b16 %v2524, %v2523
    %v2562 = vpack.c.b16 %v2526, %v2525
    %v2563 = vpack.c.b16 %v2528, %v2527
    %v2564 = vpack.c.b16 %v2530, %v2529
    %v2565 = vpack.c.b16 %v2532, %v2531
    %v2566 = vpack.c.b16 %v2534, %v2533
    %2599 = vmatprep.subr.bf16.mxu0 0
    %2600 = vmatpush1.bf16.msra.mxu0 %v2535
    %2601 = vmatprep.subr.bf16.mxu0 0
    %2602 = vmatpush1.bf16.msra.mxu0 %v2536
    %2603 = vmatprep.subr.bf16.mxu0 0
    %2604 = vmatpush1.bf16.msra.mxu0 %v2537
    %2605 = vmatprep.subr.bf16.mxu0 0
    %2606 = vmatpush1.bf16.msra.mxu0 %v2538
    %2607 = vmatprep.subr.bf16.mxu0 0
    %2608 = vmatpush1.bf16.msra.mxu0 %v2539
    %2609 = vmatprep.subr.bf16.mxu0 0
    %2610 = vmatpush1.bf16.msra.mxu0 %v2540
    %2611 = vmatprep.subr.bf16.mxu0 0
    %2612 = vmatpush1.bf16.msra.mxu0 %v2541
    %2613 = vmatprep.subr.bf16.mxu0 0
    %2614 = vmatpush1.bf16.msra.mxu0 %v2542
    %2615 = vmatprep.subr.bf16.mxu0 0
    %2616 = vmatpush1.bf16.msra.mxu0 %v2543
    %2617 = vmatprep.subr.bf16.mxu0 0
    %2618 = vmatpush1.bf16.msra.mxu0 %v2544
    %2619 = vmatprep.subr.bf16.mxu0 0
    %2620 = vmatpush1.bf16.msra.mxu0 %v2545
    %2621 = vmatprep.subr.bf16.mxu0 0
    %2622 = vmatpush1.bf16.msra.mxu0 %v2546
    %2623 = vmatprep.subr.bf16.mxu0 0
    %2624 = vmatpush1.bf16.msra.mxu0 %v2547
    %2625 = vmatprep.subr.bf16.mxu0 0
    %2626 = vmatpush1.bf16.msra.mxu0 %v2548
    %2627 = vmatprep.subr.bf16.mxu0 0
    %2628 = vmatpush1.bf16.msra.mxu0 %v2549
    %2629 = vmatprep.subr.bf16.mxu0 0
    %2630 = vmatpush1.bf16.msra.mxu0 %v2550
    %2631 = vmatprep.mubr.bf16.mxu0 %v2333
    %2632 = vmatmul.mubr.bf16.gmra.mrb[0].mxu0 %v2332
    %v2633 = vpop.f32.mrb[0].mxu0
    %v2634 = vadd.f32 %v2405, %v2633
    %v2635 = vpop.f32.mrb[0].mxu0
    %v2636 = vpop.f32.mrb[0].mxu0
    %v2637 = vpop.f32.mrb[0].mxu0
    %2638 = vdwg.mxu0
    %2639 = vmatprep.subr.bf16.mxu0 0
    %2640 = vmatpush1.bf16.msra.mxu0 %v2551
    %2641 = vmatprep.subr.bf16.mxu0 0
    %2642 = vmatpush1.bf16.msra.mxu0 %v2552
    %2643 = vmatprep.subr.bf16.mxu0 0
    %2644 = vmatpush1.bf16.msra.mxu0 %v2553
    %2645 = vmatprep.subr.bf16.mxu0 0
    %2646 = vmatpush1.bf16.msra.mxu0 %v2554
    %2647 = vmatprep.subr.bf16.mxu0 0
    %2648 = vmatpush1.bf16.msra.mxu0 %v2555
    %2649 = vmatprep.subr.bf16.mxu0 0
    %2650 = vmatpush1.bf16.msra.mxu0 %v2556
    %2651 = vmatprep.subr.bf16.mxu0 0
    %2652 = vmatpush1.bf16.msra.mxu0 %v2557
    %2653 = vmatprep.subr.bf16.mxu0 0
    %2654 = vmatpush1.bf16.msra.mxu0 %v2558
    %2655 = vmatprep.subr.bf16.mxu0 0
    %2656 = vmatpush1.bf16.msra.mxu0 %v2559
    %2657 = vmatprep.subr.bf16.mxu0 0
    %2658 = vmatpush1.bf16.msra.mxu0 %v2560
    %2659 = vmatprep.subr.bf16.mxu0 0
    %2660 = vmatpush1.bf16.msra.mxu0 %v2561
    %2661 = vmatprep.subr.bf16.mxu0 0
    %2662 = vmatpush1.bf16.msra.mxu0 %v2562
    %2663 = vmatprep.subr.bf16.mxu0 0
    %2664 = vmatpush1.bf16.msra.mxu0 %v2563
    %2665 = vmatprep.subr.bf16.mxu0 0
    %2666 = vmatpush1.bf16.msra.mxu0 %v2564
    %2667 = vmatprep.subr.bf16.mxu0 0
    %2668 = vmatpush1.bf16.msra.mxu0 %v2565
    %2669 = vmatprep.subr.bf16.mxu0 0
    %2670 = vmatpush1.bf16.msra.mxu0 %v2566
    %2671 = vmatprep.mubr.bf16.mxu0 %v2335
    %2672 = vmatmul.mubr.bf16.gmra.mrb[0].mxu0 %v2334
    %v2673 = vpop.f32.mrb[0].mxu0
    %v2674 = vadd.f32 %v2634, %v2673
    %v2675 = vpop.f32.mrb[0].mxu0
    %v2676 = vpop.f32.mrb[0].mxu0
    %v2677 = vpop.f32.mrb[0].mxu0
    %2678 = vdwg.mxu0
    %2679 = vst [vmem:[#allocation13] sm:$0xff] %v2674
    %2680 = vst [vmem:[%s14] sm:$0xff] %v1364
    %2681 = vst [vmem:[%s14 + $0x8] sm:$0xff] %v1366
    %2682 = vst [vmem:[%s14 + $0x10] sm:$0xff] %v1405
    %2683 = vst [vmem:[%s14 + $0x18] sm:$0xff] %v1407
    // Predicated region
    $region78: #{vae_forward.1} parent=1 // pred_check
      _
    $region79: #{vae_forward.1} parent=1 // pred_check_branch
      %2685 = sbr.rel (0) target = $region81
    $region80: #{vae_forward.1} parent=1 // pred_region
      %s2687 = ssub.s32 128, 128
      %2688 = vsyncadd [#allocation4], %s2687
      %s2690 = sshll.u32 [#allocation13], 4
      %s2691 = int_to_ptr.vmem [resolvable:$true] %s2690
      %2693 = dma.vmem_to_hbm [thread:$0]  %s2691, 128, %s13, [#allocation4]
    $region81: #{vae_forward.1} parent=1 // pred_fallthru
      _
    // Predicated region
    $region82: #{vae_forward.1} parent=1 // pred_check
      _
    $region83: #{vae_forward.1} parent=1 // pred_check_branch
      %2695 = sbr.rel (0) target = $region85
    $region84: #{vae_forward.1} parent=1 // pred_region
      _
    $region85: #{vae_forward.1} parent=1 // pred_fallthru
      _
    // Predicated region
    $region86: #{vae_forward.1} parent=1 // pred_check
      _
    $region87: #{vae_forward.1} parent=1 // pred_check_branch
      %2697 = sbr.rel (0) target = $region89
    $region88: #{vae_forward.1} parent=1 // pred_region
      %2698 = dma.done [#allocation4], 128
    $region89: #{vae_forward.1} parent=1 // pred_fallthru
      _
    // Predicated region
    $region90: #{vae_forward.1} parent=1 // pred_check
      _
    $region91: #{vae_forward.1} parent=1 // pred_check_branch
      %2700 = sbr.rel (0) target = $region93
    $region92: #{vae_forward.1} parent=1 // pred_region
      _
    $region93: #{vae_forward.1} parent=1 // pred_fallthru
      _
    %2701 = vsyncpa [#allocation3], 1
    %2702 = vsyncpa [#allocation6], 1
    %2703 = vsyncpa [#allocation9], 1
    %2704 = vsyncpa [#allocation12], 1
    %2705 = vsyncpa [#allocation4], 1

</llo_original>
